<compile_context>
chip_gen: v7x
topology: tpu7x:2x2x1
jax: 0.10.0
libtpu: 0.0.40
codegen_flags: <defaults>
</compile_context>

<pallas_src>
import functools

import jax
import jax.numpy as jnp
import numpy as np
from jax import lax
from jax.experimental import pallas as pl
from jax.experimental.pallas import tpu as pltpu

TM = 512          # rows per grid step == lane width of the transposed activations
CHUNK = 8         # sublane-rows per finalize normalization chunk
NEG_BIG = -1e30   # logit value for padded / out-of-range rows


# ------------------------------ fused kernel ---------------------------------
def chooser_kernel(ends_ref,                      # SMEM (G,) i32: inclusive end row of each group
                   xt_ref,                        # (D, TM)   columns = rows of this tile
                   w1t_ref, b1c_ref,              # (128, D), (128, 1)
                   w2t_ref, b2c_ref,              # (64, 128), (64, 1)
                   w3t_ref, b3c_ref,              # (16, 64),  (16, 1)
                   w4c_ref, b4_ref,               # (16, 1),   (1, 1)
                   out_ref,                       # (NT_PAD, TM) resident output (exp, then softmax)
                   gacc_ref,                      # VMEM (G_PAD, TM) per-group partial sums
                   *, tm, n_total, nt, nt_pad, num_groups, chunk):
    i = pl.program_id(0)

    @pl.when(i == 0)
    def _init():
        gacc_ref[...] = jnp.zeros_like(gacc_ref)

    # ---------------- MLP for this row tile, (features, rows) layout ---------
    # No in-kernel transposes: every contraction is a plain A @ B.
    h1 = jnp.tanh(jnp.dot(w1t_ref[...], xt_ref[...],
                          preferred_element_type=jnp.float32) + b1c_ref[...])   # (128, TM)
    h2 = jnp.tanh(jnp.dot(w2t_ref[...], h1,
                          preferred_element_type=jnp.float32) + b2c_ref[...])   # (64, TM)
    h3 = jnp.tanh(jnp.dot(w3t_ref[...], h2,
                          preferred_element_type=jnp.float32) + b3c_ref[...])   # (16, TM)
    # 16 -> 1 head: VPU broadcast-multiply + sublane reduce -> lane-dense (1, TM)
    logit = jnp.sum(h3 * w4c_ref[...], axis=0, keepdims=True) + b4_ref[...]

    # Softmax is shift-invariant: subtract the static upper bound on |logit|
    # (tanh in [-1,1] => |logit| <= sum|w4| + |b4|) instead of the data-dependent
    # global max -> no cross-tile max pass, exp never overflows.
    bound = jnp.sum(jnp.abs(w4c_ref[...])) + jnp.sum(jnp.abs(b4_ref[...]))
    lane = lax.broadcasted_iota(jnp.int32, (1, tm), 1) + i * tm
    logit = jnp.where(lane < n_total, logit - bound, NEG_BIG)   # pad lanes -> -1e30
    e = jnp.exp(logit)                                          # pad lanes -> 0
    out_ref[pl.ds(i, 1), :] = e

    # streaming per-group partial sums (groups are contiguous [lo+1, hi])
    lo = -1
    for g in range(num_groups):                   # static, tiny G
        hi = ends_ref[g]                          # scalar read from SMEM
        in_g = (lane > lo) & (lane <= hi)
        gacc_ref[pl.ds(g, 1), :] = gacc_ref[pl.ds(g, 1), :] + jnp.where(in_g, e, 0.0)
        lo = hi

    # ---------------- finalize: combine G sums, normalize in place -----------
    @pl.when(i == nt - 1)
    def _finalize():
        gsum = [jnp.sum(gacc_ref[pl.ds(g, 1), :]) for g in range(num_groups)]

        if nt_pad > nt:   # static: zero the never-written pad rows
            out_ref[pl.ds(nt, nt_pad - nt), :] = jnp.zeros((nt_pad - nt, tm),
                                                           jnp.float32)

        def norm_chunk(c, carry):
            r0 = pl.multiple_of(c * chunk, chunk)
            gid = (lax.broadcasted_iota(jnp.int32, (chunk, tm), 0) * tm
                   + lax.broadcasted_iota(jnp.int32, (chunk, tm), 1)
                   + r0 * tm)                                   # flat row index
            d = jnp.ones((chunk, tm), jnp.float32)              # pad rows -> denom 1
            lo_ = -1
            for g in range(num_groups):
                hi_ = ends_ref[g]
                d = jnp.where((gid > lo_) & (gid <= hi_), gsum[g], d)
                lo_ = hi_
            d = jnp.where(d > 0.0, d, 1.0)                      # avoid 0-div
            r = pl.reciprocal(d, approx=True)                   # EUP
            r = r * (2.0 - d * r)                               # Newton -> ~f32 exact
            out_ref[pl.ds(r0, chunk), :] = out_ref[pl.ds(r0, chunk), :] * r
            return carry

        lax.fori_loop(0, nt_pad // chunk, norm_chunk, 0, unroll=False)


# ------------------------------- wrapper --------------------------------------
def chooser_forward(x_list, params):
    """Mirrors Chooser.forward: x_list is a list of (n_i, input_dim) arrays."""
    sizes_np = np.array([e.shape[0] for e in x_list], dtype=np.int32)
    n = int(sizes_np.sum())
    num_groups = len(x_list)
    x_flat = jnp.concatenate(x_list, axis=0)                            # (N, D)
    xt = x_flat.T                                                       # (D, N): one host-side layout change
    end_inds = jnp.asarray(np.cumsum(sizes_np) - 1, dtype=jnp.int32)    # (G,)

    w1, b1, w2, b2, w3, b3, w4, b4 = params          # w: (in, out), b: (1, out)
    # kernel-side layouts: (out, in) weights, column biases
    w1t, b1c = w1.T, b1.reshape(-1, 1)               # (128, D), (128, 1)
    w2t, b2c = w2.T, b2.reshape(-1, 1)               # (64, 128), (64, 1)
    w3t, b3c = w3.T, b3.reshape(-1, 1)               # (16, 64),  (16, 1)
    w4c, b4s = w4, b4                                # (16, 1),   (1, 1)

    d = x_flat.shape[1]
    nt = pl.cdiv(n, TM)
    nt_pad = ((nt + CHUNK - 1) // CHUNK) * CHUNK     # rows of the output slab
    g_pad = max(8, ((num_groups + 7) // 8) * 8)

    def full_spec(a):  # whole (small) array resident in VMEM, fetched once
        return pl.BlockSpec(a.shape, lambda i, ends: (0, 0))

    kernel = functools.partial(chooser_kernel, tm=TM, n_total=n, nt=nt,
                               nt_pad=nt_pad, num_groups=num_groups, chunk=CHUNK)

    # resident output + generous headroom for x double-buffer, weights and
    # transient activations; clamped under the v7x 64 MiB physical ceiling.
    resident_bytes = nt_pad * TM * 4
    vmem_limit = int(min(resident_bytes + (16 << 20), 56 << 20))

    out = pl.pallas_call(
        kernel,
        out_shape=jax.ShapeDtypeStruct((nt_pad, TM), jnp.float32),
        grid_spec=pltpu.PrefetchScalarGridSpec(
            num_scalar_prefetch=1,                   # end_inds -> SMEM
            grid=(nt,),
            in_specs=[pl.BlockSpec((d, TM), lambda i, ends: (0, i)),
                      full_spec(w1t), full_spec(b1c),
                      full_spec(w2t), full_spec(b2c),
                      full_spec(w3t), full_spec(b3c),
                      full_spec(w4c), full_spec(b4s)],
            out_specs=pl.BlockSpec((nt_pad, TM), lambda i, ends: (0, 0)),
            scratch_shapes=[pltpu.VMEM((g_pad, TM), jnp.float32)]),
        compiler_params=pltpu.CompilerParams(
            # output / group accumulators carry across the row-tile axis
            dimension_semantics=("arbitrary",),
            vmem_limit_bytes=vmem_limit),
    )(end_inds, xt, w1t, b1c, w2t, b2c, w3t, b3c, w4c, b4s)

    res = out.reshape(-1)[:n]                        # drop pad, lane-dense tiles -> (N,)
    return res, jnp.asarray(sizes_np)


# ---------------------------- params / reference ------------------------------
def init_params(input_dim, key):
    dims = [input_dim, 128, 64, 16, 1]
    params = []
    for i in range(4):
        key, kw, kb = jax.random.split(key, 3)
        scale = 1.0 / np.sqrt(dims[i])
        w = jax.random.uniform(kw, (dims[i], dims[i + 1]),
                               minval=-scale, maxval=scale, dtype=jnp.float32)
        b = jax.random.uniform(kb, (1, dims[i + 1]),
                               minval=-scale, maxval=scale, dtype=jnp.float32)
        params += [w, b]
    return tuple(params)


def reference_forward(x_list, params):
    w1, b1, w2, b2, w3, b3, w4, b4 = params
    x = jnp.concatenate(x_list, axis=0)
    h = jnp.tanh(x @ w1 + b1)
    h = jnp.tanh(h @ w2 + b2)
    h = jnp.tanh(h @ w3 + b3)
    logits = h @ w4 + b4                                   # (N, 1)
    e = jnp.exp(logits - jnp.max(logits))[:, 0]
    sizes_np = np.array([t.shape[0] for t in x_list])
    seg = np.repeat(np.arange(len(x_list)), sizes_np)
    denom = jax.ops.segment_sum(e, jnp.asarray(seg), num_segments=len(x_list))
    return e / denom[seg], jnp.asarray(sizes_np, dtype=jnp.int32)


# --------------------------------- main ----------------------------------------
if __name__ == "__main__":
    input_dim = 32
    group_sizes = [5, 9, 10]                 # list input of variable-length groups

    key = jax.random.PRNGKey(0)
    key, pkey = jax.random.split(key)
    params = init_params(input_dim, pkey)

    x_list = []
    for n in group_sizes:
        key, sub = jax.random.split(key)
        x_list.append(jax.random.normal(sub, (n, input_dim), dtype=jnp.float32))

    res, sizes = chooser_forward(x_list, params)
    res = jax.block_until_ready(res)

    ref_res, ref_sizes = reference_forward(x_list, params)
    assert res.shape == (sum(group_sizes),)
    assert np.allclose(np.asarray(res), np.asarray(ref_res), rtol=1e-5, atol=1e-6)
    assert np.array_equal(np.asarray(sizes), np.asarray(ref_sizes))

    print("KERNEL_OK")
</pallas_src>

<mosaic_0001>
module attributes {stable_mosaic.version = 11 : i64} {
  func.func @chooser_kernel(%arg0: i32, %arg1: memref<3xi32, #tpu.memory_space<smem>>, %arg2: memref<32x512xf32, #tpu.memory_space<vmem>>, %arg3: memref<128x32xf32, #tpu.memory_space<vmem>>, %arg4: memref<128x1xf32, #tpu.memory_space<vmem>>, %arg5: memref<64x128xf32, #tpu.memory_space<vmem>>, %arg6: memref<64x1xf32, #tpu.memory_space<vmem>>, %arg7: memref<16x64xf32, #tpu.memory_space<vmem>>, %arg8: memref<16x1xf32, #tpu.memory_space<vmem>>, %arg9: memref<16x1xf32, #tpu.memory_space<vmem>>, %arg10: memref<1x1xf32, #tpu.memory_space<vmem>>, %arg11: memref<8x512xf32, #tpu.memory_space<vmem>>, %arg12: memref<8x512xf32, #tpu.memory_space<vmem>>) attributes {dimension_semantics = [#tpu.dimension_semantics<arbitrary>], iteration_bounds = array<i64: 1>, scalar_prefetch = 1 : i64, scratch_operands = 1 : i64, tpu.core_type = #tpu.core_type<tc>, window_params = [{transform_indices = @transform_0, window_bounds = array<i64: 32, 512>}, {pipeline_mode = #tpu.pipeline_mode<synchronous>, transform_indices = @transform_1, window_bounds = array<i64: 128, 32>}, {pipeline_mode = #tpu.pipeline_mode<synchronous>, transform_indices = @transform_2, window_bounds = array<i64: 128, 1>}, {pipeline_mode = #tpu.pipeline_mode<synchronous>, transform_indices = @transform_3, window_bounds = array<i64: 64, 128>}, {pipeline_mode = #tpu.pipeline_mode<synchronous>, transform_indices = @transform_4, window_bounds = array<i64: 64, 1>}, {pipeline_mode = #tpu.pipeline_mode<synchronous>, transform_indices = @transform_5, window_bounds = array<i64: 16, 64>}, {pipeline_mode = #tpu.pipeline_mode<synchronous>, transform_indices = @transform_6, window_bounds = array<i64: 16, 1>}, {pipeline_mode = #tpu.pipeline_mode<synchronous>, transform_indices = @transform_7, window_bounds = array<i64: 16, 1>}, {pipeline_mode = #tpu.pipeline_mode<synchronous>, transform_indices = @transform_8, window_bounds = array<i64: 1, 1>}, {pipeline_mode = #tpu.pipeline_mode<synchronous>, transform_indices = @transform_9, window_bounds = array<i64: 8, 512>}]} {
    %c0_i32 = arith.constant 0 : i32
    %0 = arith.cmpi eq, %arg0, %c0_i32 : i32
    %1 = arith.extui %0 : i1 to i32
    %c0_i32_0 = arith.constant 0 : i32
    %2 = arith.cmpi ne, %1, %c0_i32_0 : i32
    scf.if %2 {
      %cst_47 = arith.constant 0.000000e+00 : f32
      %92 = vector.broadcast %cst_47 : f32 to vector<8x512xf32>
      %c0_48 = arith.constant 0 : index
      %c0_49 = arith.constant 0 : index
      %93 = vector.load %arg12[%c0_48, %c0_49] : memref<8x512xf32, #tpu.memory_space<vmem>>, vector<8x512xf32>
      tpu.vector_store %arg12[%c0_48, %c0_49], %92 {strides = array<i32>} : memref<8x512xf32, #tpu.memory_space<vmem>>, vector<8x512xf32>,
    } else {
    }
    %c0 = arith.constant 0 : index
    %c0_1 = arith.constant 0 : index
    %3 = vector.load %arg3[%c0, %c0_1] : memref<128x32xf32, #tpu.memory_space<vmem>>, vector<128x32xf32>
    %c0_2 = arith.constant 0 : index
    %c0_3 = arith.constant 0 : index
    %4 = vector.load %arg2[%c0_2, %c0_3] : memref<32x512xf32, #tpu.memory_space<vmem>>, vector<32x512xf32>
    %cst = arith.constant dense<0.000000e+00> : vector<128x512xf32>
    %5 = tpu.matmul %3, %4, %cst {dimension_numbers = #tpu.dot_dimension_numbers<[1], [0], [0], [1], [0, 0, 1, 1], [], []>} : vector<128x32xf32>, vector<32x512xf32>, vector<128x512xf32> -> vector<128x512xf32>
    %c0_4 = arith.constant 0 : index
    %c0_5 = arith.constant 0 : index
    %6 = vector.load %arg4[%c0_4, %c0_5] : memref<128x1xf32, #tpu.memory_space<vmem>>, vector<128x1xf32>
    %7 = vector.broadcast %6 : vector<128x1xf32> to vector<128x512xf32>
    %8 = arith.addf %5, %7 : vector<128x512xf32>
    %9 = math.tanh %8 : vector<128x512xf32>
    %c0_6 = arith.constant 0 : index
    %c0_7 = arith.constant 0 : index
    %10 = vector.load %arg5[%c0_6, %c0_7] : memref<64x128xf32, #tpu.memory_space<vmem>>, vector<64x128xf32>
    %cst_8 = arith.constant dense<0.000000e+00> : vector<64x512xf32>
    %11 = tpu.matmul %10, %9, %cst_8 {dimension_numbers = #tpu.dot_dimension_numbers<[1], [0], [0], [1], [0, 0, 1, 1], [], []>} : vector<64x128xf32>, vector<128x512xf32>, vector<64x512xf32> -> vector<64x512xf32>
    %c0_9 = arith.constant 0 : index
    %c0_10 = arith.constant 0 : index
    %12 = vector.load %arg6[%c0_9, %c0_10] : memref<64x1xf32, #tpu.memory_space<vmem>>, vector<64x1xf32>
    %13 = vector.broadcast %12 : vector<64x1xf32> to vector<64x512xf32>
    %14 = arith.addf %11, %13 : vector<64x512xf32>
    %15 = math.tanh %14 : vector<64x512xf32>
    %c0_11 = arith.constant 0 : index
    %c0_12 = arith.constant 0 : index
    %16 = vector.load %arg7[%c0_11, %c0_12] : memref<16x64xf32, #tpu.memory_space<vmem>>, vector<16x64xf32>
    %cst_13 = arith.constant dense<0.000000e+00> : vector<16x512xf32>
    %17 = tpu.matmul %16, %15, %cst_13 {dimension_numbers = #tpu.dot_dimension_numbers<[1], [0], [0], [1], [0, 0, 1, 1], [], []>} : vector<16x64xf32>, vector<64x512xf32>, vector<16x512xf32> -> vector<16x512xf32>
    %c0_14 = arith.constant 0 : index
    %c0_15 = arith.constant 0 : index
    %18 = vector.load %arg8[%c0_14, %c0_15] : memref<16x1xf32, #tpu.memory_space<vmem>>, vector<16x1xf32>
    %19 = vector.broadcast %18 : vector<16x1xf32> to vector<16x512xf32>
    %20 = arith.addf %17, %19 : vector<16x512xf32>
    %21 = math.tanh %20 : vector<16x512xf32>
    %c0_16 = arith.constant 0 : index
    %c0_17 = arith.constant 0 : index
    %22 = vector.load %arg9[%c0_16, %c0_17] : memref<16x1xf32, #tpu.memory_space<vmem>>, vector<16x1xf32>
    %23 = vector.broadcast %22 : vector<16x1xf32> to vector<16x512xf32>
    %24 = arith.mulf %21, %23 : vector<16x512xf32>
    %cst_18 = arith.constant dense<0.000000e+00> : vector<512xf32>
    %25 = vector.multi_reduction <add>, %24, %cst_18 [0] : vector<16x512xf32> to vector<512xf32>
    %26 = vector.shape_cast %25 : vector<512xf32> to vector<1x512xf32>
    %c0_19 = arith.constant 0 : index
    %c0_20 = arith.constant 0 : index
    %27 = vector.load %arg10[%c0_19, %c0_20] : memref<1x1xf32, #tpu.memory_space<vmem>>, vector<1x1xf32>
    %28 = vector.broadcast %27 : vector<1x1xf32> to vector<1x512xf32>
    %29 = arith.addf %26, %28 : vector<1x512xf32>
    %c0_21 = arith.constant 0 : index
    %c0_22 = arith.constant 0 : index
    %30 = vector.load %arg9[%c0_21, %c0_22] : memref<16x1xf32, #tpu.memory_space<vmem>>, vector<16x1xf32>
    %31 = math.absf %30 : vector<16x1xf32>
    %32 = vector.shape_cast %31 : vector<16x1xf32> to vector<1x16x1xf32>
    %cst_23 = arith.constant dense<0.000000e+00> : vector<1xf32>
    %33 = vector.multi_reduction <add>, %32, %cst_23 [1, 2] : vector<1x16x1xf32> to vector<1xf32>
    %34 = vector.shape_cast %33 : vector<1xf32> to vector<1x1x1xf32>
    %35 = vector.extract %34[0, 0, 0] : f32 from vector<1x1x1xf32>
    %c0_24 = arith.constant 0 : index
    %c0_25 = arith.constant 0 : index
    %36 = vector.load %arg10[%c0_24, %c0_25] : memref<1x1xf32, #tpu.memory_space<vmem>>, vector<1x1xf32>
    %37 = math.absf %36 : vector<1x1xf32>
    %38 = vector.shape_cast %37 : vector<1x1xf32> to vector<1x1x1xf32>
    %cst_26 = arith.constant dense<0.000000e+00> : vector<1xf32>
    %39 = vector.multi_reduction <add>, %38, %cst_26 [1, 2] : vector<1x1x1xf32> to vector<1xf32>
    %40 = vector.shape_cast %39 : vector<1xf32> to vector<1x1x1xf32>
    %41 = vector.extract %40[0, 0, 0] : f32 from vector<1x1x1xf32>
    %42 = arith.addf %35, %41 : f32
    %43 = tpu.iota {dimensions = array<i32: 1>} : vector<1x512xi32>
    %c512_i32 = arith.constant 512 : i32
    %44 = arith.muli %arg0, %c512_i32 : i32
    %45 = vector.broadcast %44 : i32 to vector<1x512xi32>
    %46 = arith.addi %43, %45 : vector<1x512xi32>
    %c24_i32 = arith.constant 24 : i32
    %47 = vector.broadcast %c24_i32 : i32 to vector<1x512xi32>
    %48 = arith.cmpi slt, %46, %47 : vector<1x512xi32>
    %49 = vector.broadcast %42 : f32 to vector<1x512xf32>
    %50 = arith.subf %29, %49 : vector<1x512xf32>
    %cst_27 = arith.constant -1.000000e+30 : f32
    %51 = vector.broadcast %cst_27 : f32 to vector<1x512xf32>
    %52 = arith.select %48, %50, %51 : vector<1x512xi1>, vector<1x512xf32>
    %53 = math.exp %52 : vector<1x512xf32>
    %54 = arith.index_cast %arg0 : i32 to index
    %c0_28 = arith.constant 0 : index
    %55 = vector.load %arg11[%54, %c0_28] : memref<8x512xf32, #tpu.memory_space<vmem>>, vector<1x512xf32>
    tpu.vector_store %arg11[%54, %c0_28], %53 {strides = array<i32>} : memref<8x512xf32, #tpu.memory_space<vmem>>, vector<1x512xf32>,
    %c0_29 = arith.constant 0 : index
    %56 = memref.load %arg1[%c0_29] : memref<3xi32, #tpu.memory_space<smem>>
    %c-1_i32 = arith.constant -1 : i32
    %57 = vector.broadcast %c-1_i32 : i32 to vector<1x512xi32>
    %58 = arith.cmpi sgt, %46, %57 : vector<1x512xi32>
    %59 = vector.broadcast %56 : i32 to vector<1x512xi32>
    %60 = arith.cmpi sle, %46, %59 : vector<1x512xi32>
    %61 = arith.andi %58, %60 : vector<1x512xi1>
    %c0_30 = arith.constant 0 : index
    %c0_31 = arith.constant 0 : index
    %62 = vector.load %arg12[%c0_30, %c0_31] : memref<8x512xf32, #tpu.memory_space<vmem>>, vector<1x512xf32>
    %cst_32 = arith.constant 0.000000e+00 : f32
    %63 = vector.broadcast %cst_32 : f32 to vector<1x512xf32>
    %64 = arith.select %61, %53, %63 : vector<1x512xi1>, vector<1x512xf32>
    %65 = arith.addf %62, %64 : vector<1x512xf32>
    %c0_33 = arith.constant 0 : index
    %c0_34 = arith.constant 0 : index
    %66 = vector.load %arg12[%c0_33, %c0_34] : memref<8x512xf32, #tpu.memory_space<vmem>>, vector<1x512xf32>
    tpu.vector_store %arg12[%c0_33, %c0_34], %65 {strides = array<i32>} : memref<8x512xf32, #tpu.memory_space<vmem>>, vector<1x512xf32>,
    %c1 = arith.constant 1 : index
    %67 = memref.load %arg1[%c1] : memref<3xi32, #tpu.memory_space<smem>>
    %68 = vector.broadcast %56 : i32 to vector<1x512xi32>
    %69 = arith.cmpi sgt, %46, %68 : vector<1x512xi32>
    %70 = vector.broadcast %67 : i32 to vector<1x512xi32>
    %71 = arith.cmpi sle, %46, %70 : vector<1x512xi32>
    %72 = arith.andi %69, %71 : vector<1x512xi1>
    %c1_35 = arith.constant 1 : index
    %c0_36 = arith.constant 0 : index
    %73 = vector.load %arg12[%c1_35, %c0_36] : memref<8x512xf32, #tpu.memory_space<vmem>>, vector<1x512xf32>
    %cst_37 = arith.constant 0.000000e+00 : f32
    %74 = vector.broadcast %cst_37 : f32 to vector<1x512xf32>
    %75 = arith.select %72, %53, %74 : vector<1x512xi1>, vector<1x512xf32>
    %76 = arith.addf %73, %75 : vector<1x512xf32>
    %c1_38 = arith.constant 1 : index
    %c0_39 = arith.constant 0 : index
    %77 = vector.load %arg12[%c1_38, %c0_39] : memref<8x512xf32, #tpu.memory_space<vmem>>, vector<1x512xf32>
    tpu.vector_store %arg12[%c1_38, %c0_39], %76 {strides = array<i32>} : memref<8x512xf32, #tpu.memory_space<vmem>>, vector<1x512xf32>,
    %c2 = arith.constant 2 : index
    %78 = memref.load %arg1[%c2] : memref<3xi32, #tpu.memory_space<smem>>
    %79 = vector.broadcast %67 : i32 to vector<1x512xi32>
    %80 = arith.cmpi sgt, %46, %79 : vector<1x512xi32>
    %81 = vector.broadcast %78 : i32 to vector<1x512xi32>
    %82 = arith.cmpi sle, %46, %81 : vector<1x512xi32>
    %83 = arith.andi %80, %82 : vector<1x512xi1>
    %c2_40 = arith.constant 2 : index
    %c0_41 = arith.constant 0 : index
    %84 = vector.load %arg12[%c2_40, %c0_41] : memref<8x512xf32, #tpu.memory_space<vmem>>, vector<1x512xf32>
    %cst_42 = arith.constant 0.000000e+00 : f32
    %85 = vector.broadcast %cst_42 : f32 to vector<1x512xf32>
    %86 = arith.select %83, %53, %85 : vector<1x512xi1>, vector<1x512xf32>
    %87 = arith.addf %84, %86 : vector<1x512xf32>
    %c2_43 = arith.constant 2 : index
    %c0_44 = arith.constant 0 : index
    %88 = vector.load %arg12[%c2_43, %c0_44] : memref<8x512xf32, #tpu.memory_space<vmem>>, vector<1x512xf32>
    tpu.vector_store %arg12[%c2_43, %c0_44], %87 {strides = array<i32>} : memref<8x512xf32, #tpu.memory_space<vmem>>, vector<1x512xf32>,
    %c0_i32_45 = arith.constant 0 : i32
    %89 = arith.cmpi eq, %arg0, %c0_i32_45 : i32
    %90 = arith.extui %89 : i1 to i32
    %c0_i32_46 = arith.constant 0 : i32
    %91 = arith.cmpi ne, %90, %c0_i32_46 : i32
    scf.if %91 {
      %c0_47 = arith.constant 0 : index
      %c0_48 = arith.constant 0 : index
      %92 = vector.load %arg12[%c0_47, %c0_48] : memref<8x512xf32, #tpu.memory_space<vmem>>, vector<1x512xf32>
      %93 = vector.shape_cast %92 : vector<1x512xf32> to vector<1x1x512xf32>
      %cst_49 = arith.constant dense<0.000000e+00> : vector<1xf32>
      %94 = vector.multi_reduction <add>, %93, %cst_49 [1, 2] : vector<1x1x512xf32> to vector<1xf32>
      %95 = vector.shape_cast %94 : vector<1xf32> to vector<1x1x1xf32>
      %96 = vector.extract %95[0, 0, 0] : f32 from vector<1x1x1xf32>
      %c1_50 = arith.constant 1 : index
      %c0_51 = arith.constant 0 : index
      %97 = vector.load %arg12[%c1_50, %c0_51] : memref<8x512xf32, #tpu.memory_space<vmem>>, vector<1x512xf32>
      %98 = vector.shape_cast %97 : vector<1x512xf32> to vector<1x1x512xf32>
      %cst_52 = arith.constant dense<0.000000e+00> : vector<1xf32>
      %99 = vector.multi_reduction <add>, %98, %cst_52 [1, 2] : vector<1x1x512xf32> to vector<1xf32>
      %100 = vector.shape_cast %99 : vector<1xf32> to vector<1x1x1xf32>
      %101 = vector.extract %100[0, 0, 0] : f32 from vector<1x1x1xf32>
      %c2_53 = arith.constant 2 : index
      %c0_54 = arith.constant 0 : index
      %102 = vector.load %arg12[%c2_53, %c0_54] : memref<8x512xf32, #tpu.memory_space<vmem>>, vector<1x512xf32>
      %103 = vector.shape_cast %102 : vector<1x512xf32> to vector<1x1x512xf32>
      %cst_55 = arith.constant dense<0.000000e+00> : vector<1xf32>
      %104 = vector.multi_reduction <add>, %103, %cst_55 [1, 2] : vector<1x1x512xf32> to vector<1xf32>
      %105 = vector.shape_cast %104 : vector<1xf32> to vector<1x1x1xf32>
      %106 = vector.extract %105[0, 0, 0] : f32 from vector<1x1x1xf32>
      %cst_56 = arith.constant 0.000000e+00 : f32
      %107 = vector.broadcast %cst_56 : f32 to vector<7x512xf32>
      %c1_57 = arith.constant 1 : index
      %c0_58 = arith.constant 0 : index
      %108 = vector.load %arg11[%c1_57, %c0_58] : memref<8x512xf32, #tpu.memory_space<vmem>>, vector<7x512xf32>
      tpu.vector_store %arg11[%c1_57, %c0_58], %107 {strides = array<i32>} : memref<8x512xf32, #tpu.memory_space<vmem>>, vector<7x512xf32>,
      %c0_i32_59 = arith.constant 0 : i32
      %c8_i32 = arith.constant 8 : i32
      %109 = arith.muli %c0_i32_59, %c8_i32 : i32
      %110 = tpu.assume_multiple %109, 8 : i32
      %111 = tpu.iota {dimensions = array<i32: 0>} : vector<8x512xi32>
      %c512_i32_60 = arith.constant 512 : i32
      %112 = vector.broadcast %c512_i32_60 : i32 to vector<8x512xi32>
      %113 = arith.muli %111, %112 : vector<8x512xi32>
      %114 = tpu.iota {dimensions = array<i32: 1>} : vector<8x512xi32>
      %115 = arith.addi %113, %114 : vector<8x512xi32>
      %c512_i32_61 = arith.constant 512 : i32
      %116 = arith.muli %110, %c512_i32_61 : i32
      %117 = vector.broadcast %116 : i32 to vector<8x512xi32>
      %118 = arith.addi %115, %117 : vector<8x512xi32>
      %cst_62 = arith.constant 1.000000e+00 : f32
      %119 = vector.broadcast %cst_62 : f32 to vector<8x512xf32>
      %c0_63 = arith.constant 0 : index
      %120 = memref.load %arg1[%c0_63] : memref<3xi32, #tpu.memory_space<smem>>
      %c-1_i32_64 = arith.constant -1 : i32
      %121 = vector.broadcast %c-1_i32_64 : i32 to vector<8x512xi32>
      %122 = arith.cmpi sgt, %118, %121 : vector<8x512xi32>
      %123 = vector.broadcast %120 : i32 to vector<8x512xi32>
      %124 = arith.cmpi sle, %118, %123 : vector<8x512xi32>
      %125 = arith.andi %122, %124 : vector<8x512xi1>
      %126 = vector.broadcast %96 : f32 to vector<8x512xf32>
      %127 = arith.select %125, %126, %119 : vector<8x512xi1>, vector<8x512xf32>
      %c1_65 = arith.constant 1 : index
      %128 = memref.load %arg1[%c1_65] : memref<3xi32, #tpu.memory_space<smem>>
      %129 = vector.broadcast %120 : i32 to vector<8x512xi32>
      %130 = arith.cmpi sgt, %118, %129 : vector<8x512xi32>
      %131 = vector.broadcast %128 : i32 to vector<8x512xi32>
      %132 = arith.cmpi sle, %118, %131 : vector<8x512xi32>
      %133 = arith.andi %130, %132 : vector<8x512xi1>
      %134 = vector.broadcast %101 : f32 to vector<8x512xf32>
      %135 = arith.select %133, %134, %127 : vector<8x512xi1>, vector<8x512xf32>
      %c2_66 = arith.constant 2 : index
      %136 = memref.load %arg1[%c2_66] : memref<3xi32, #tpu.memory_space<smem>>
      %137 = vector.broadcast %128 : i32 to vector<8x512xi32>
      %138 = arith.cmpi sgt, %118, %137 : vector<8x512xi32>
      %139 = vector.broadcast %136 : i32 to vector<8x512xi32>
      %140 = arith.cmpi sle, %118, %139 : vector<8x512xi32>
      %141 = arith.andi %138, %140 : vector<8x512xi1>
      %142 = vector.broadcast %106 : f32 to vector<8x512xf32>
      %143 = arith.select %141, %142, %135 : vector<8x512xi1>, vector<8x512xf32>
      %cst_67 = arith.constant 0.000000e+00 : f32
      %144 = vector.broadcast %cst_67 : f32 to vector<8x512xf32>
      %145 = arith.cmpf ogt, %143, %144 : vector<8x512xf32>
      %cst_68 = arith.constant 1.000000e+00 : f32
      %146 = vector.broadcast %cst_68 : f32 to vector<8x512xf32>
      %147 = arith.select %145, %143, %146 : vector<8x512xi1>, vector<8x512xf32>
      %148 = tpu.reciprocal %147 {approx = true} : vector<8x512xf32> -> vector<8x512xf32>
      %149 = arith.mulf %147, %148 : vector<8x512xf32>
      %cst_69 = arith.constant 2.000000e+00 : f32
      %150 = vector.broadcast %cst_69 : f32 to vector<8x512xf32>
      %151 = arith.subf %150, %149 : vector<8x512xf32>
      %152 = arith.mulf %148, %151 : vector<8x512xf32>
      %153 = arith.index_cast %110 : i32 to index
      %c0_70 = arith.constant 0 : index
      %154 = vector.load %arg11[%153, %c0_70] : memref<8x512xf32, #tpu.memory_space<vmem>>, vector<8x512xf32>
      %155 = arith.mulf %154, %152 : vector<8x512xf32>
      %156 = arith.index_cast %110 : i32 to index
      %c0_71 = arith.constant 0 : index
      %157 = vector.load %arg11[%156, %c0_71] : memref<8x512xf32, #tpu.memory_space<vmem>>, vector<8x512xf32>
      tpu.vector_store %arg11[%156, %c0_71], %155 {strides = array<i32>} : memref<8x512xf32, #tpu.memory_space<vmem>>, vector<8x512xf32>,
      %c1_i32 = arith.constant 1 : i32
    } else {
    }
    return
  }
  func.func @transform_0(%arg0: i32, %arg1: memref<3xi32, #tpu.memory_space<smem>>) -> (i32, i32) {
    %c0_i32 = arith.constant 0 : i32
    %c0_i32_0 = arith.constant 0 : i32
    return %c0_i32, %arg0 : i32, i32
  }
  func.func @transform_1(%arg0: i32, %arg1: memref<3xi32, #tpu.memory_space<smem>>) -> (i32, i32) {
    %c0_i32 = arith.constant 0 : i32
    %c0_i32_0 = arith.constant 0 : i32
    %c0_i32_1 = arith.constant 0 : i32
    return %c0_i32, %c0_i32_0 : i32, i32
  }
  func.func @transform_2(%arg0: i32, %arg1: memref<3xi32, #tpu.memory_space<smem>>) -> (i32, i32) {
    %c0_i32 = arith.constant 0 : i32
    %c0_i32_0 = arith.constant 0 : i32
    %c0_i32_1 = arith.constant 0 : i32
    return %c0_i32, %c0_i32_0 : i32, i32
  }
  func.func @transform_3(%arg0: i32, %arg1: memref<3xi32, #tpu.memory_space<smem>>) -> (i32, i32) {
    %c0_i32 = arith.constant 0 : i32
    %c0_i32_0 = arith.constant 0 : i32
    %c0_i32_1 = arith.constant 0 : i32
    return %c0_i32, %c0_i32_0 : i32, i32
  }
  func.func @transform_4(%arg0: i32, %arg1: memref<3xi32, #tpu.memory_space<smem>>) -> (i32, i32) {
    %c0_i32 = arith.constant 0 : i32
    %c0_i32_0 = arith.constant 0 : i32
    %c0_i32_1 = arith.constant 0 : i32
    return %c0_i32, %c0_i32_0 : i32, i32
  }
  func.func @transform_5(%arg0: i32, %arg1: memref<3xi32, #tpu.memory_space<smem>>) -> (i32, i32) {
    %c0_i32 = arith.constant 0 : i32
    %c0_i32_0 = arith.constant 0 : i32
    %c0_i32_1 = arith.constant 0 : i32
    return %c0_i32, %c0_i32_0 : i32, i32
  }
  func.func @transform_6(%arg0: i32, %arg1: memref<3xi32, #tpu.memory_space<smem>>) -> (i32, i32) {
    %c0_i32 = arith.constant 0 : i32
    %c0_i32_0 = arith.constant 0 : i32
    %c0_i32_1 = arith.constant 0 : i32
    return %c0_i32, %c0_i32_0 : i32, i32
  }
  func.func @transform_7(%arg0: i32, %arg1: memref<3xi32, #tpu.memory_space<smem>>) -> (i32, i32) {
    %c0_i32 = arith.constant 0 : i32
    %c0_i32_0 = arith.constant 0 : i32
    %c0_i32_1 = arith.constant 0 : i32
    return %c0_i32, %c0_i32_0 : i32, i32
  }
  func.func @transform_8(%arg0: i32, %arg1: memref<3xi32, #tpu.memory_space<smem>>) -> (i32, i32) {
    %c0_i32 = arith.constant 0 : i32
    %c0_i32_0 = arith.constant 0 : i32
    %c0_i32_1 = arith.constant 0 : i32
    return %c0_i32, %c0_i32_0 : i32, i32
  }
  func.func @transform_9(%arg0: i32, %arg1: memref<3xi32, #tpu.memory_space<smem>>) -> (i32, i32) {
    %c0_i32 = arith.constant 0 : i32
    %c0_i32_0 = arith.constant 0 : i32
    %c0_i32_1 = arith.constant 0 : i32
    return %c0_i32, %c0_i32_0 : i32, i32
  }
}

</mosaic_0001>

<llo_original>
// kernel: tpu_custom_call.1
$region0: #{tpu_custom_call.1}
  #allocation0 [shape = 'u32[]', space=smem, size = 0x4, offset = 0x4, fixed_abs, tag = 'smem constant byte address 0x4 - core index']
  #allocation1 [shape = 'u32[144,128]{1,0:T(1,128)}', space=vmem, size = 0x12000, scoped, tag = 'internal scratch']
  #allocation2 [shape = 'f32[8,512]{1,0:T(8,128)}', space=vmem, size = 0x4000, scoped, tag = 'scratch operand']
  #allocation3 [shape = 's32[1]{0}', space=sflag, size = 0x4, scoped, tag = 'scoped memory for tpu_custom_call.1']
  #allocation4 [shape = 'u8[512]{0}', space=smem, size = 0x200, scoped, tag = 'prefetched SMEM operand 0']
  #allocation5 [shape = 'f32[1,1]{1,0:T(1,128)S(1)}', space=vmem, size = 0x200, scoped, tag = 'scoped memory for tpu_custom_call.1']
  %s0 = inlined_call_operand.vmem [shape: s32[3], index: 0, kind: input, shape index: {}]
  %s1 = inlined_call_operand.vmem [shape: f32[32,24], index: 1, kind: input, shape index: {}]
  %s2 = inlined_call_operand.vmem [shape: f32[128,32], index: 2, kind: input, shape index: {}]
  %s3 = inlined_call_operand.vmem [shape: f32[128,1], index: 3, kind: input, shape index: {}]
  %s4 = inlined_call_operand.vmem [shape: f32[64,128], index: 4, kind: input, shape index: {}]
  %s5 = inlined_call_operand.vmem [shape: f32[64,1], index: 5, kind: input, shape index: {}]
  %s6 = inlined_call_operand.vmem [shape: f32[16,64], index: 6, kind: input, shape index: {}]
  %s7 = inlined_call_operand.vmem [shape: f32[16,1], index: 7, kind: input, shape index: {}]
  %s8 = inlined_call_operand.vmem [shape: f32[16,1], index: 8, kind: input, shape index: {}]
  %s9 = inlined_call_operand.<no memory space> [shape: f32[1,1], index: 9, kind: input, shape index: {}]
  %s10 = inlined_call_operand.hbm [shape: f32[8,512], index: 10, kind: output, shape index: {}]
  %s11 = sld [smem:[#allocation0]]
  $region92: #{tpu_custom_call.1} parent=0
    _
  %s13 = ssub.s32 1, %s11
  %s14 = scalar_select 0, %s13, %s11
  %s15 = sshll.u32 %s0, 4
  %s16 = int_to_ptr.vmem [resolvable:$true] %s15
  %18 = dma.vmem_to_smem %s16, 16, [#allocation4], [#allocation3]
  %v19 = vstv %s9
  %20 = vst [vmem:[#allocation5] sm:$0x1] %v19
  %21 = dma.done [#allocation3], 16
  %22 = sfence
  $region1: #{tpu_custom_call.1} parent=0
    #allocation6 [shape = 'u8[65536]{0}', space=vmem, size = 0x10000, scoped, tag = 'input window, operand 1, single buffered']
    #allocation7 [shape = 'u8[16384]{0}', space=vmem, size = 0x4000, scoped, tag = 'output window, operand 0, single buffered']
    #allocation8 [shape = 's32[1]{0}', space=sflag, size = 0x4, scoped, tag = 'scoped memory for tpu_custom_call.1']
    %23 = vsyncpa [#allocation8], 0
    // Predicated region
    $region2: #{tpu_custom_call.1} parent=1 // pred_check
      _
    $region3: #{tpu_custom_call.1} parent=1 // pred_check_branch
      %25 = sbr.rel (0) target = $region5
    $region4: #{tpu_custom_call.1} parent=1 // pred_region
      // Predicated region
      $region6: #{tpu_custom_call.1} parent=4 // pred_check
        _
      $region7: #{tpu_custom_call.1} parent=4 // pred_check_branch
        %27 = sbr.rel (0) target = $region9
      $region8: #{tpu_custom_call.1} parent=4 // pred_region
        // Predicated region
        $region10: #{tpu_custom_call.1} parent=8 // pred_check
          _
        $region11: #{tpu_custom_call.1} parent=8 // pred_check_branch
          %29 = sbr.rel (0) target = $region13
        $region12: #{tpu_custom_call.1} parent=8 // pred_region
          // Predicated region
          $region25: #{tpu_custom_call.1} parent=12 // pred_check
            _
          $region26: #{tpu_custom_call.1} parent=12 // pred_check_branch
            %50 = sbr.rel (0) target = $region28
          $region27: #{tpu_custom_call.1} parent=12 // pred_region
            loop: start=0, step=1, limit=1
            $region29: #{tpu_custom_call.1} parent=27 // loop_pre_header
              _
            $region30: #{tpu_custom_call.1} parent=27 // loop_header
              %s52 = sphi 0, %s56
              %p53 = scmp.ge.s32.totalorder %s52, 1
              %s57 = sphi %s1, %s1
              %s58 = sphi [#allocation6], [#allocation6]
            $region31: #{tpu_custom_call.1} parent=27 // loop_header_branch
              %55 = sbr.rel (%p53) target = $region35
            $region32: #{tpu_custom_call.1} parent=27 // loop_body
              %v59 = vld [vmem:[%s57] sm:$0xff]
              %60 = vst [vmem:[%s58] sm:$0xff] %v59
              %v61 = vld [vmem:[%s57 + $0x8] sm:$0xff]
              %62 = vst [vmem:[%s58 + $0x20] sm:$0xff] %v61
              %v63 = vld [vmem:[%s57 + $0x10] sm:$0xff]
              %64 = vst [vmem:[%s58 + $0x40] sm:$0xff] %v63
              %v65 = vld [vmem:[%s57 + $0x18] sm:$0xff]
              %66 = vst [vmem:[%s58 + $0x60] sm:$0xff] %v65
            $region33: #{tpu_custom_call.1} parent=27 // loop_footer
              %s56 = sadd.s32 1, %s52
            $region34: #{tpu_custom_call.1} parent=27 // loop_footer_branch
              %51 = sbr.rel target = $region30
            $region35: #{tpu_custom_call.1} parent=27 // loop_exit
              _
          $region28: #{tpu_custom_call.1} parent=12 // pred_fallthru
            _
          // Predicated region
          $region36: #{tpu_custom_call.1} parent=12 // pred_check
            _
          $region37: #{tpu_custom_call.1} parent=12 // pred_check_branch
            %68 = sbr.rel target = $region39
          $region38: #{tpu_custom_call.1} parent=12 // pred_region
            _
          $region39: #{tpu_custom_call.1} parent=12 // pred_fallthru
            _
        $region13: #{tpu_custom_call.1} parent=8 // pred_fallthru
          _
        // Predicated region
        $region14: #{tpu_custom_call.1} parent=8 // pred_check
          _
        $region15: #{tpu_custom_call.1} parent=8 // pred_check_branch
          %31 = sbr.rel target = $region17
        $region16: #{tpu_custom_call.1} parent=8 // pred_region
          loop: start=0, step=1, limit=1
          $region18: #{tpu_custom_call.1} parent=16 // loop_pre_header
            _
          $region19: #{tpu_custom_call.1} parent=16 // loop_header
            %s34 = sphi 0, %s38
            %p35 = scmp.ge.s32.totalorder %s34, 1
            %s39 = sphi %s1, %s1
            %s40 = sphi [#allocation6], [#allocation6]
          $region20: #{tpu_custom_call.1} parent=16 // loop_header_branch
            %37 = sbr.rel (%p35) target = $region24
          $region21: #{tpu_custom_call.1} parent=16 // loop_body
            %v41 = vld [vmem:[%s39] sm:$0xff]
            %42 = vst [vmem:[%s40] sm:$0xff] %v41
            %v43 = vld [vmem:[%s39 + $0x8] sm:$0xff]
            %44 = vst [vmem:[%s40 + $0x20] sm:$0xff] %v43
            %v45 = vld [vmem:[%s39 + $0x10] sm:$0xff]
            %46 = vst [vmem:[%s40 + $0x40] sm:$0xff] %v45
            %v47 = vld [vmem:[%s39 + $0x18] sm:$0xff]
            %48 = vst [vmem:[%s40 + $0x60] sm:$0xff] %v47
          $region22: #{tpu_custom_call.1} parent=16 // loop_footer
            %s38 = sadd.s32 1, %s34
          $region23: #{tpu_custom_call.1} parent=16 // loop_footer_branch
            %33 = sbr.rel target = $region19
          $region24: #{tpu_custom_call.1} parent=16 // loop_exit
            _
        $region17: #{tpu_custom_call.1} parent=8 // pred_fallthru
          _
      $region9: #{tpu_custom_call.1} parent=4 // pred_fallthru
        _
      %69 = vnop
    $region5: #{tpu_custom_call.1} parent=1 // pred_fallthru
      _
    // Predicated region
    $region40: #{tpu_custom_call.1} parent=1 // pred_check
      _
    $region41: #{tpu_custom_call.1} parent=1 // pred_check_branch
      %71 = sbr.rel (0) target = $region43
    $region42: #{tpu_custom_call.1} parent=1 // pred_region
      _
    $region43: #{tpu_custom_call.1} parent=1 // pred_fallthru
      _
    // Predicated region
    $region44: #{tpu_custom_call.1} parent=1 // pred_check
      _
    $region45: #{tpu_custom_call.1} parent=1 // pred_check_branch
      %73 = sbr.rel (0) target = $region47
    $region46: #{tpu_custom_call.1} parent=1 // pred_region
      _
    $region47: #{tpu_custom_call.1} parent=1 // pred_fallthru
      _
    // Predicated region
    $region48: #{tpu_custom_call.1} parent=1 // pred_check
      _
    $region49: #{tpu_custom_call.1} parent=1 // pred_check_branch
      %75 = sbr.rel (0) target = $region51
    $region50: #{tpu_custom_call.1} parent=1 // pred_region
      _
    $region51: #{tpu_custom_call.1} parent=1 // pred_fallthru
      _
    // Predicated region
    $region52: #{tpu_custom_call.1} parent=1 // pred_check
      _
    $region53: #{tpu_custom_call.1} parent=1 // pred_check_branch
      %77 = sbr.rel (0) target = $region55
    $region54: #{tpu_custom_call.1} parent=1 // pred_region
      _
    $region55: #{tpu_custom_call.1} parent=1 // pred_fallthru
      _
    // Predicated region
    $region56: #{tpu_custom_call.1} parent=1 // pred_check
      _
    $region57: #{tpu_custom_call.1} parent=1 // pred_check_branch
      %79 = sbr.rel (0) target = $region59
    $region58: #{tpu_custom_call.1} parent=1 // pred_region
      _
    $region59: #{tpu_custom_call.1} parent=1 // pred_fallthru
      _
    // Predicated region
    $region60: #{tpu_custom_call.1} parent=1 // pred_check
      _
    $region61: #{tpu_custom_call.1} parent=1 // pred_check_branch
      %81 = sbr.rel (0) target = $region63
    $region62: #{tpu_custom_call.1} parent=1 // pred_region
      _
    $region63: #{tpu_custom_call.1} parent=1 // pred_fallthru
      _
    // Predicated region
    $region64: #{tpu_custom_call.1} parent=1 // pred_check
      _
    $region65: #{tpu_custom_call.1} parent=1 // pred_check_branch
      %83 = sbr.rel (0) target = $region67
    $region66: #{tpu_custom_call.1} parent=1 // pred_region
      _
    $region67: #{tpu_custom_call.1} parent=1 // pred_fallthru
      _
    // Predicated region
    $region68: #{tpu_custom_call.1} parent=1 // pred_check
      _
    $region69: #{tpu_custom_call.1} parent=1 // pred_check_branch
      %85 = sbr.rel (0) target = $region71
    $region70: #{tpu_custom_call.1} parent=1 // pred_region
      _
    $region71: #{tpu_custom_call.1} parent=1 // pred_fallthru
      _
    // Predicated region
    $region72: #{tpu_custom_call.1} parent=1 // pred_check
      _
    $region73: #{tpu_custom_call.1} parent=1 // pred_check_branch
      %87 = sbr.rel (0) target = $region75
    $region74: #{tpu_custom_call.1} parent=1 // pred_region
      _
    $region75: #{tpu_custom_call.1} parent=1 // pred_fallthru
      _
    %p88 = scmp.eq.s32.totalorder 0, 0
    // Predicated region
    $region76: #{tpu_custom_call.1} parent=1 // pred_check
      %p89 = pneg %p88
    $region77: #{tpu_custom_call.1} parent=1 // pred_check_branch
      %91 = sbr.rel (%p89) target = $region79
    $region78: #{tpu_custom_call.1} parent=1 // pred_region
      %92 = vst [vmem:[#allocation2] sm:$0xff] 0.0
      %93 = vst [vmem:[#allocation2 + $0x8] sm:$0xff] 0.0
      %94 = vst [vmem:[#allocation2 + $0x10] sm:$0xff] 0.0
      %95 = vst [vmem:[#allocation2 + $0x18] sm:$0xff] 0.0
    $region79: #{tpu_custom_call.1} parent=1 // pred_fallthru
      _
    %v96 = vld [vmem:[%s2] sm:$0xff]
    %v97 = vld [vmem:[%s2 + $0x8] sm:$0xff]
    %v98 = vld [vmem:[%s2 + $0x10] sm:$0xff]
    %v99 = vld [vmem:[%s2 + $0x18] sm:$0xff]
    %v100 = vld [vmem:[%s2 + $0x20] sm:$0xff]
    %v101 = vld [vmem:[%s2 + $0x28] sm:$0xff]
    %v102 = vld [vmem:[%s2 + $0x30] sm:$0xff]
    %v103 = vld [vmem:[%s2 + $0x38] sm:$0xff]
    %v104 = vld [vmem:[%s2 + $0x40] sm:$0xff]
    %v105 = vld [vmem:[%s2 + $0x48] sm:$0xff]
    %v106 = vld [vmem:[%s2 + $0x50] sm:$0xff]
    %v107 = vld [vmem:[%s2 + $0x58] sm:$0xff]
    %v108 = vld [vmem:[%s2 + $0x60] sm:$0xff]
    %v109 = vld [vmem:[%s2 + $0x68] sm:$0xff]
    %v110 = vld [vmem:[%s2 + $0x70] sm:$0xff]
    %v111 = vld [vmem:[%s2 + $0x78] sm:$0xff]
    %v112 = vld [vmem:[#allocation6] sm:$0xff]
    %v113 = vld [vmem:[#allocation6 + $0x8] sm:$0xff]
    %v114 = vld [vmem:[#allocation6 + $0x10] sm:$0xff]
    %v115 = vld [vmem:[#allocation6 + $0x18] sm:$0xff]
    %v116 = vld [vmem:[#allocation6 + $0x20] sm:$0xff]
    %v117 = vld [vmem:[#allocation6 + $0x28] sm:$0xff]
    %v118 = vld [vmem:[#allocation6 + $0x30] sm:$0xff]
    %v119 = vld [vmem:[#allocation6 + $0x38] sm:$0xff]
    %v120 = vld [vmem:[#allocation6 + $0x40] sm:$0xff]
    %v121 = vld [vmem:[#allocation6 + $0x48] sm:$0xff]
    %v122 = vld [vmem:[#allocation6 + $0x50] sm:$0xff]
    %v123 = vld [vmem:[#allocation6 + $0x58] sm:$0xff]
    %v124 = vld [vmem:[#allocation6 + $0x60] sm:$0xff]
    %v125 = vld [vmem:[#allocation6 + $0x68] sm:$0xff]
    %v126 = vld [vmem:[#allocation6 + $0x70] sm:$0xff]
    %v127 = vld [vmem:[#allocation6 + $0x78] sm:$0xff]
    %v128 = vld [vmem:[%s3] sm:$0xff]
    %v129 = vld [vmem:[%s3 + $0x8] sm:$0xff]
    %v130 = vld [vmem:[%s3 + $0x10] sm:$0xff]
    %v131 = vld [vmem:[%s3 + $0x18] sm:$0xff]
    %v132 = vld [vmem:[%s3 + $0x20] sm:$0xff]
    %v133 = vld [vmem:[%s3 + $0x28] sm:$0xff]
    %v134 = vld [vmem:[%s3 + $0x30] sm:$0xff]
    %v135 = vld [vmem:[%s3 + $0x38] sm:$0xff]
    %v136 = vld [vmem:[%s3 + $0x40] sm:$0xff]
    %v137 = vld [vmem:[%s3 + $0x48] sm:$0xff]
    %v138 = vld [vmem:[%s3 + $0x50] sm:$0xff]
    %v139 = vld [vmem:[%s3 + $0x58] sm:$0xff]
    %v140 = vld [vmem:[%s3 + $0x60] sm:$0xff]
    %v141 = vld [vmem:[%s3 + $0x68] sm:$0xff]
    %v142 = vld [vmem:[%s3 + $0x70] sm:$0xff]
    %v143 = vld [vmem:[%s3 + $0x78] sm:$0xff]
    %145 = vset.pattern.permute.xlu0 0
    %146 = vperm.xlu0 %145, %v128
    %v147 = vpop.permute.xlu0 %146
    %150 = vset.pattern.permute.xlu0 0
    %151 = vperm.xlu0 %150, %v129
    %v152 = vpop.permute.xlu0 %151
    %155 = vset.pattern.permute.xlu0 0
    %156 = vperm.xlu0 %155, %v130
    %v157 = vpop.permute.xlu0 %156
    %160 = vset.pattern.permute.xlu0 0
    %161 = vperm.xlu0 %160, %v131
    %v162 = vpop.permute.xlu0 %161
    %165 = vset.pattern.permute.xlu0 0
    %166 = vperm.xlu0 %165, %v132
    %v167 = vpop.permute.xlu0 %166
    %170 = vset.pattern.permute.xlu0 0
    %171 = vperm.xlu0 %170, %v133
    %v172 = vpop.permute.xlu0 %171
    %175 = vset.pattern.permute.xlu0 0
    %176 = vperm.xlu0 %175, %v134
    %v177 = vpop.permute.xlu0 %176
    %180 = vset.pattern.permute.xlu0 0
    %181 = vperm.xlu0 %180, %v135
    %v182 = vpop.permute.xlu0 %181
    %185 = vset.pattern.permute.xlu0 0
    %186 = vperm.xlu0 %185, %v136
    %v187 = vpop.permute.xlu0 %186
    %190 = vset.pattern.permute.xlu0 0
    %191 = vperm.xlu0 %190, %v137
    %v192 = vpop.permute.xlu0 %191
    %195 = vset.pattern.permute.xlu0 0
    %196 = vperm.xlu0 %195, %v138
    %v197 = vpop.permute.xlu0 %196
    %200 = vset.pattern.permute.xlu0 0
    %201 = vperm.xlu0 %200, %v139
    %v202 = vpop.permute.xlu0 %201
    %205 = vset.pattern.permute.xlu0 0
    %206 = vperm.xlu0 %205, %v140
    %v207 = vpop.permute.xlu0 %206
    %210 = vset.pattern.permute.xlu0 0
    %211 = vperm.xlu0 %210, %v141
    %v212 = vpop.permute.xlu0 %211
    %215 = vset.pattern.permute.xlu0 0
    %216 = vperm.xlu0 %215, %v142
    %v217 = vpop.permute.xlu0 %216
    %220 = vset.pattern.permute.xlu0 0
    %221 = vperm.xlu0 %220, %v143
    %v222 = vpop.permute.xlu0 %221
    %vm224 = vcmask 261120
    %v226 = vsel %vm224, %v96, 0
    %v229 = vsel %vm224, %v97, 0
    %v232 = vsel %vm224, %v98, 0
    %v235 = vsel %vm224, %v99, 0
    %v238 = vsel %vm224, %v100, 0
    %v241 = vsel %vm224, %v101, 0
    %v244 = vsel %vm224, %v102, 0
    %v247 = vsel %vm224, %v103, 0
    %v250 = vsel %vm224, %v104, 0
    %v253 = vsel %vm224, %v105, 0
    %v256 = vsel %vm224, %v106, 0
    %v259 = vsel %vm224, %v107, 0
    %v262 = vsel %vm224, %v108, 0
    %v265 = vsel %vm224, %v109, 0
    %v268 = vsel %vm224, %v110, 0
    %v271 = vsel %vm224, %v111, 0
    %273 = vmatprep.subr.mxu0 %v113
    %274 = vmatpush1.msra.mxu0 %v112
    %275 = vmatprep.subr.mxu0 %v117
    %276 = vmatpush1.msra.mxu0 %v116
    %277 = vmatprep.subr.mxu0 %v121
    %278 = vmatpush1.msra.mxu0 %v120
    %279 = vmatprep.subr.mxu0 %v125
    %280 = vmatpush1.msra.mxu0 %v124
    %281 = vmatprep.subr.mxu0 0.0
    %282 = vmatpush1.msra.mxu0 0.0
    %283 = vmatprep.subr.mxu0 0.0
    %284 = vmatpush1.msra.mxu0 0.0
    %285 = vmatprep.subr.mxu0 0.0
    %286 = vmatpush1.msra.mxu0 0.0
    %287 = vmatprep.subr.mxu0 0.0
    %288 = vmatpush1.msra.mxu0 0.0
    %289 = vmatprep.subr.mxu0 0.0
    %290 = vmatpush1.msra.mxu0 0.0
    %291 = vmatprep.subr.mxu0 0.0
    %292 = vmatpush1.msra.mxu0 0.0
    %293 = vmatprep.subr.mxu0 0.0
    %294 = vmatpush1.msra.mxu0 0.0
    %295 = vmatprep.subr.mxu0 0.0
    %296 = vmatpush1.msra.mxu0 0.0
    %297 = vmatprep.subr.mxu0 0.0
    %298 = vmatpush1.msra.mxu0 0.0
    %299 = vmatprep.subr.mxu0 0.0
    %300 = vmatpush1.msra.mxu0 0.0
    %301 = vmatprep.subr.mxu0 0.0
    %302 = vmatpush1.msra.mxu0 0.0
    %303 = vmatprep.subr.mxu0 0.0
    %304 = vmatpush1.msra.mxu0 0.0
    %305 = vmatprep.subr.mxu0 0.0
    %306 = vmatpush1.msra.mxu0 0.0
    %307 = vmatprep.subr.mxu0 0.0
    %308 = vmatpush1.msra.mxu0 0.0
    %309 = vmatprep.subr.mxu0 0.0
    %310 = vmatpush1.msra.mxu0 0.0
    %311 = vmatprep.subr.mxu0 0.0
    %312 = vmatpush1.msra.mxu0 0.0
    %313 = vmatprep.subr.mxu0 0.0
    %314 = vmatpush1.msra.mxu0 0.0
    %315 = vmatprep.subr.mxu0 0.0
    %316 = vmatpush1.msra.mxu0 0.0
    %317 = vmatprep.subr.mxu0 0.0
    %318 = vmatpush1.msra.mxu0 0.0
    %319 = vmatprep.subr.mxu0 0.0
    %320 = vmatpush1.msra.mxu0 0.0
    %321 = vmatprep.subr.mxu0 0.0
    %322 = vmatpush1.msra.mxu0 0.0
    %323 = vmatprep.subr.mxu0 0.0
    %324 = vmatpush1.msra.mxu0 0.0
    %325 = vmatprep.subr.mxu0 0.0
    %326 = vmatpush1.msra.mxu0 0.0
    %327 = vmatprep.subr.mxu0 0.0
    %328 = vmatpush1.msra.mxu0 0.0
    %329 = vmatprep.subr.mxu0 0.0
    %330 = vmatpush1.msra.mxu0 0.0
    %331 = vmatprep.subr.mxu0 0.0
    %332 = vmatpush1.msra.mxu0 0.0
    %333 = vmatprep.subr.mxu0 0.0
    %334 = vmatpush1.msra.mxu0 0.0
    %335 = vmatprep.subr.mxu0 0.0
    %336 = vmatpush1.msra.mxu0 0.0
    %337 = vmatprep.mubr.f32.mxu0 0.0
    %338 = vmatmul.mubr.f32.gmra.mrb[0].mxu0 %v226
    %v339 = vpop.f32.mrb[0].mxu0
    %v340 = vadd.f32 %v147, %v339
    %v341 = vpop.f32.mrb[0].mxu0
    %v342 = vadd.f32 %v147, %v341
    %343 = vmatprep.mubr.f32.mxu0 0.0
    %344 = vmatmul.mubr.f32.gmra.mrb[0].mxu0 %v229
    %v345 = vpop.f32.mrb[0].mxu0
    %v346 = vadd.f32 %v152, %v345
    %v347 = vpop.f32.mrb[0].mxu0
    %v348 = vadd.f32 %v152, %v347
    %349 = vmatprep.mubr.f32.mxu0 0.0
    %350 = vmatmul.mubr.f32.gmra.mrb[0].mxu0 %v232
    %v351 = vpop.f32.mrb[0].mxu0
    %v352 = vadd.f32 %v157, %v351
    %v353 = vpop.f32.mrb[0].mxu0
    %v354 = vadd.f32 %v157, %v353
    %355 = vmatprep.mubr.f32.mxu0 0.0
    %356 = vmatmul.mubr.f32.gmra.mrb[0].mxu0 %v235
    %v357 = vpop.f32.mrb[0].mxu0
    %v358 = vadd.f32 %v162, %v357
    %v359 = vpop.f32.mrb[0].mxu0
    %v360 = vadd.f32 %v162, %v359
    %361 = vmatprep.mubr.f32.mxu0 0.0
    %362 = vmatmul.mubr.f32.gmra.mrb[0].mxu0 %v238
    %v363 = vpop.f32.mrb[0].mxu0
    %v364 = vadd.f32 %v167, %v363
    %v365 = vpop.f32.mrb[0].mxu0
    %v366 = vadd.f32 %v167, %v365
    %367 = vmatprep.mubr.f32.mxu0 0.0
    %368 = vmatmul.mubr.f32.gmra.mrb[0].mxu0 %v241
    %v369 = vpop.f32.mrb[0].mxu0
    %v370 = vadd.f32 %v172, %v369
    %v371 = vpop.f32.mrb[0].mxu0
    %v372 = vadd.f32 %v172, %v371
    %373 = vmatprep.mubr.f32.mxu0 0.0
    %374 = vmatmul.mubr.f32.gmra.mrb[0].mxu0 %v244
    %v375 = vpop.f32.mrb[0].mxu0
    %v376 = vadd.f32 %v177, %v375
    %v377 = vpop.f32.mrb[0].mxu0
    %v378 = vadd.f32 %v177, %v377
    %379 = vmatprep.mubr.f32.mxu0 0.0
    %380 = vmatmul.mubr.f32.gmra.mrb[0].mxu0 %v247
    %v381 = vpop.f32.mrb[0].mxu0
    %v382 = vadd.f32 %v182, %v381
    %v383 = vpop.f32.mrb[0].mxu0
    %v384 = vadd.f32 %v182, %v383
    %385 = vmatprep.mubr.f32.mxu0 0.0
    %386 = vmatmul.mubr.f32.gmra.mrb[0].mxu0 %v250
    %v387 = vpop.f32.mrb[0].mxu0
    %v388 = vadd.f32 %v187, %v387
    %v389 = vpop.f32.mrb[0].mxu0
    %v390 = vadd.f32 %v187, %v389
    %391 = vmatprep.mubr.f32.mxu0 0.0
    %392 = vmatmul.mubr.f32.gmra.mrb[0].mxu0 %v253
    %v393 = vpop.f32.mrb[0].mxu0
    %v394 = vadd.f32 %v192, %v393
    %v395 = vpop.f32.mrb[0].mxu0
    %v396 = vadd.f32 %v192, %v395
    %397 = vmatprep.mubr.f32.mxu0 0.0
    %398 = vmatmul.mubr.f32.gmra.mrb[0].mxu0 %v256
    %v399 = vpop.f32.mrb[0].mxu0
    %v400 = vadd.f32 %v197, %v399
    %v401 = vpop.f32.mrb[0].mxu0
    %v402 = vadd.f32 %v197, %v401
    %403 = vmatprep.mubr.f32.mxu0 0.0
    %404 = vmatmul.mubr.f32.gmra.mrb[0].mxu0 %v259
    %v405 = vpop.f32.mrb[0].mxu0
    %v406 = vadd.f32 %v202, %v405
    %v407 = vpop.f32.mrb[0].mxu0
    %v408 = vadd.f32 %v202, %v407
    %409 = vmatprep.mubr.f32.mxu0 0.0
    %410 = vmatmul.mubr.f32.gmra.mrb[0].mxu0 %v262
    %v411 = vpop.f32.mrb[0].mxu0
    %v412 = vadd.f32 %v207, %v411
    %v413 = vpop.f32.mrb[0].mxu0
    %v414 = vadd.f32 %v207, %v413
    %415 = vmatprep.mubr.f32.mxu0 0.0
    %416 = vmatmul.mubr.f32.gmra.mrb[0].mxu0 %v265
    %v417 = vpop.f32.mrb[0].mxu0
    %v418 = vadd.f32 %v212, %v417
    %v419 = vpop.f32.mrb[0].mxu0
    %v420 = vadd.f32 %v212, %v419
    %421 = vmatprep.mubr.f32.mxu0 0.0
    %422 = vmatmul.mubr.f32.gmra.mrb[0].mxu0 %v268
    %v423 = vpop.f32.mrb[0].mxu0
    %v424 = vadd.f32 %v217, %v423
    %v425 = vpop.f32.mrb[0].mxu0
    %v426 = vadd.f32 %v217, %v425
    %427 = vmatprep.mubr.f32.mxu0 0.0
    %428 = vmatmul.mubr.f32.gmra.mrb[0].mxu0 %v271
    %v429 = vpop.f32.mrb[0].mxu0
    %v430 = vadd.f32 %v222, %v429
    %v431 = vpop.f32.mrb[0].mxu0
    %v432 = vadd.f32 %v222, %v431
    %433 = vdwg.mxu0
    %434 = vmatprep.subr.mxu0 %v115
    %435 = vmatpush1.msra.mxu0 %v114
    %436 = vmatprep.subr.mxu0 %v119
    %437 = vmatpush1.msra.mxu0 %v118
    %438 = vmatprep.subr.mxu0 %v123
    %439 = vmatpush1.msra.mxu0 %v122
    %440 = vmatprep.subr.mxu0 %v127
    %441 = vmatpush1.msra.mxu0 %v126
    %442 = vmatprep.subr.mxu0 0.0
    %443 = vmatpush1.msra.mxu0 0.0
    %444 = vmatprep.subr.mxu0 0.0
    %445 = vmatpush1.msra.mxu0 0.0
    %446 = vmatprep.subr.mxu0 0.0
    %447 = vmatpush1.msra.mxu0 0.0
    %448 = vmatprep.subr.mxu0 0.0
    %449 = vmatpush1.msra.mxu0 0.0
    %450 = vmatprep.subr.mxu0 0.0
    %451 = vmatpush1.msra.mxu0 0.0
    %452 = vmatprep.subr.mxu0 0.0
    %453 = vmatpush1.msra.mxu0 0.0
    %454 = vmatprep.subr.mxu0 0.0
    %455 = vmatpush1.msra.mxu0 0.0
    %456 = vmatprep.subr.mxu0 0.0
    %457 = vmatpush1.msra.mxu0 0.0
    %458 = vmatprep.subr.mxu0 0.0
    %459 = vmatpush1.msra.mxu0 0.0
    %460 = vmatprep.subr.mxu0 0.0
    %461 = vmatpush1.msra.mxu0 0.0
    %462 = vmatprep.subr.mxu0 0.0
    %463 = vmatpush1.msra.mxu0 0.0
    %464 = vmatprep.subr.mxu0 0.0
    %465 = vmatpush1.msra.mxu0 0.0
    %466 = vmatprep.subr.mxu0 0.0
    %467 = vmatpush1.msra.mxu0 0.0
    %468 = vmatprep.subr.mxu0 0.0
    %469 = vmatpush1.msra.mxu0 0.0
    %470 = vmatprep.subr.mxu0 0.0
    %471 = vmatpush1.msra.mxu0 0.0
    %472 = vmatprep.subr.mxu0 0.0
    %473 = vmatpush1.msra.mxu0 0.0
    %474 = vmatprep.subr.mxu0 0.0
    %475 = vmatpush1.msra.mxu0 0.0
    %476 = vmatprep.subr.mxu0 0.0
    %477 = vmatpush1.msra.mxu0 0.0
    %478 = vmatprep.subr.mxu0 0.0
    %479 = vmatpush1.msra.mxu0 0.0
    %480 = vmatprep.subr.mxu0 0.0
    %481 = vmatpush1.msra.mxu0 0.0
    %482 = vmatprep.subr.mxu0 0.0
    %483 = vmatpush1.msra.mxu0 0.0
    %484 = vmatprep.subr.mxu0 0.0
    %485 = vmatpush1.msra.mxu0 0.0
    %486 = vmatprep.subr.mxu0 0.0
    %487 = vmatpush1.msra.mxu0 0.0
    %488 = vmatprep.subr.mxu0 0.0
    %489 = vmatpush1.msra.mxu0 0.0
    %490 = vmatprep.subr.mxu0 0.0
    %491 = vmatpush1.msra.mxu0 0.0
    %492 = vmatprep.subr.mxu0 0.0
    %493 = vmatpush1.msra.mxu0 0.0
    %494 = vmatprep.subr.mxu0 0.0
    %495 = vmatpush1.msra.mxu0 0.0
    %496 = vmatprep.subr.mxu0 0.0
    %497 = vmatpush1.msra.mxu0 0.0
    %498 = vmatprep.mubr.f32.mxu0 0.0
    %499 = vmatmul.mubr.f32.gmra.mrb[0].mxu0 %v226
    %v500 = vpop.f32.mrb[0].mxu0
    %v501 = vadd.f32 %v147, %v500
    %v502 = vpop.f32.mrb[0].mxu0
    %v503 = vadd.f32 %v147, %v502
    %504 = vmatprep.mubr.f32.mxu0 0.0
    %505 = vmatmul.mubr.f32.gmra.mrb[0].mxu0 %v229
    %v506 = vpop.f32.mrb[0].mxu0
    %v507 = vadd.f32 %v152, %v506
    %v508 = vpop.f32.mrb[0].mxu0
    %v509 = vadd.f32 %v152, %v508
    %510 = vmatprep.mubr.f32.mxu0 0.0
    %511 = vmatmul.mubr.f32.gmra.mrb[0].mxu0 %v232
    %v512 = vpop.f32.mrb[0].mxu0
    %v513 = vadd.f32 %v157, %v512
    %v514 = vpop.f32.mrb[0].mxu0
    %v515 = vadd.f32 %v157, %v514
    %516 = vmatprep.mubr.f32.mxu0 0.0
    %517 = vmatmul.mubr.f32.gmra.mrb[0].mxu0 %v235
    %v518 = vpop.f32.mrb[0].mxu0
    %v519 = vadd.f32 %v162, %v518
    %v520 = vpop.f32.mrb[0].mxu0
    %v521 = vadd.f32 %v162, %v520
    %522 = vmatprep.mubr.f32.mxu0 0.0
    %523 = vmatmul.mubr.f32.gmra.mrb[0].mxu0 %v238
    %v524 = vpop.f32.mrb[0].mxu0
    %v525 = vadd.f32 %v167, %v524
    %v526 = vpop.f32.mrb[0].mxu0
    %v527 = vadd.f32 %v167, %v526
    %528 = vmatprep.mubr.f32.mxu0 0.0
    %529 = vmatmul.mubr.f32.gmra.mrb[0].mxu0 %v241
    %v530 = vpop.f32.mrb[0].mxu0
    %v531 = vadd.f32 %v172, %v530
    %v532 = vpop.f32.mrb[0].mxu0
    %v533 = vadd.f32 %v172, %v532
    %534 = vmatprep.mubr.f32.mxu0 0.0
    %535 = vmatmul.mubr.f32.gmra.mrb[0].mxu0 %v244
    %v536 = vpop.f32.mrb[0].mxu0
    %v537 = vadd.f32 %v177, %v536
    %v538 = vpop.f32.mrb[0].mxu0
    %v539 = vadd.f32 %v177, %v538
    %540 = vmatprep.mubr.f32.mxu0 0.0
    %541 = vmatmul.mubr.f32.gmra.mrb[0].mxu0 %v247
    %v542 = vpop.f32.mrb[0].mxu0
    %v543 = vadd.f32 %v182, %v542
    %v544 = vpop.f32.mrb[0].mxu0
    %v545 = vadd.f32 %v182, %v544
    %546 = vmatprep.mubr.f32.mxu0 0.0
    %547 = vmatmul.mubr.f32.gmra.mrb[0].mxu0 %v250
    %v548 = vpop.f32.mrb[0].mxu0
    %v549 = vadd.f32 %v187, %v548
    %v550 = vpop.f32.mrb[0].mxu0
    %v551 = vadd.f32 %v187, %v550
    %552 = vmatprep.mubr.f32.mxu0 0.0
    %553 = vmatmul.mubr.f32.gmra.mrb[0].mxu0 %v253
    %v554 = vpop.f32.mrb[0].mxu0
    %v555 = vadd.f32 %v192, %v554
    %v556 = vpop.f32.mrb[0].mxu0
    %v557 = vadd.f32 %v192, %v556
    %558 = vmatprep.mubr.f32.mxu0 0.0
    %559 = vmatmul.mubr.f32.gmra.mrb[0].mxu0 %v256
    %v560 = vpop.f32.mrb[0].mxu0
    %v561 = vadd.f32 %v197, %v560
    %v562 = vpop.f32.mrb[0].mxu0
    %v563 = vadd.f32 %v197, %v562
    %564 = vmatprep.mubr.f32.mxu0 0.0
    %565 = vmatmul.mubr.f32.gmra.mrb[0].mxu0 %v259
    %v566 = vpop.f32.mrb[0].mxu0
    %v567 = vadd.f32 %v202, %v566
    %v568 = vpop.f32.mrb[0].mxu0
    %v569 = vadd.f32 %v202, %v568
    %570 = vmatprep.mubr.f32.mxu0 0.0
    %571 = vmatmul.mubr.f32.gmra.mrb[0].mxu0 %v262
    %v572 = vpop.f32.mrb[0].mxu0
    %v573 = vadd.f32 %v207, %v572
    %v574 = vpop.f32.mrb[0].mxu0
    %v575 = vadd.f32 %v207, %v574
    %576 = vmatprep.mubr.f32.mxu0 0.0
    %577 = vmatmul.mubr.f32.gmra.mrb[0].mxu0 %v265
    %v578 = vpop.f32.mrb[0].mxu0
    %v579 = vadd.f32 %v212, %v578
    %v580 = vpop.f32.mrb[0].mxu0
    %v581 = vadd.f32 %v212, %v580
    %582 = vmatprep.mubr.f32.mxu0 0.0
    %583 = vmatmul.mubr.f32.gmra.mrb[0].mxu0 %v268
    %v584 = vpop.f32.mrb[0].mxu0
    %v585 = vadd.f32 %v217, %v584
    %v586 = vpop.f32.mrb[0].mxu0
    %v587 = vadd.f32 %v217, %v586
    %588 = vmatprep.mubr.f32.mxu0 0.0
    %589 = vmatmul.mubr.f32.gmra.mrb[0].mxu0 %v271
    %v590 = vpop.f32.mrb[0].mxu0
    %v591 = vadd.f32 %v222, %v590
    %v592 = vpop.f32.mrb[0].mxu0
    %v593 = vadd.f32 %v222, %v592
    %594 = vdwg.mxu0
    %v595 = vtanh.pop %v340
    %v596 = vtanh.pop %v342
    %v597 = vtanh.pop %v501
    %v598 = vtanh.pop %v503
    %v599 = vtanh.pop %v346
    %v600 = vtanh.pop %v348
    %v601 = vtanh.pop %v507
    %v602 = vtanh.pop %v509
    %v603 = vtanh.pop %v352
    %v604 = vtanh.pop %v354
    %v605 = vtanh.pop %v513
    %v606 = vtanh.pop %v515
    %v607 = vtanh.pop %v358
    %v608 = vtanh.pop %v360
    %v609 = vtanh.pop %v519
    %v610 = vtanh.pop %v521
    %v611 = vtanh.pop %v364
    %v612 = vtanh.pop %v366
    %v613 = vtanh.pop %v525
    %v614 = vtanh.pop %v527
    %v615 = vtanh.pop %v370
    %v616 = vtanh.pop %v372
    %v617 = vtanh.pop %v531
    %v618 = vtanh.pop %v533
    %v619 = vtanh.pop %v376
    %v620 = vtanh.pop %v378
    %v621 = vtanh.pop %v537
    %v622 = vtanh.pop %v539
    %v623 = vtanh.pop %v382
    %v624 = vtanh.pop %v384
    %v625 = vtanh.pop %v543
    %v626 = vtanh.pop %v545
    %v627 = vtanh.pop %v388
    %v628 = vtanh.pop %v390
    %v629 = vtanh.pop %v549
    %v630 = vtanh.pop %v551
    %v631 = vtanh.pop %v394
    %v632 = vtanh.pop %v396
    %v633 = vtanh.pop %v555
    %v634 = vtanh.pop %v557
    %v635 = vtanh.pop %v400
    %v636 = vtanh.pop %v402
    %v637 = vtanh.pop %v561
    %v638 = vtanh.pop %v563
    %v639 = vtanh.pop %v406
    %v640 = vtanh.pop %v408
    %v641 = vtanh.pop %v567
    %v642 = vtanh.pop %v569
    %v643 = vtanh.pop %v412
    %v644 = vtanh.pop %v414
    %v645 = vtanh.pop %v573
    %v646 = vtanh.pop %v575
    %v647 = vtanh.pop %v418
    %v648 = vtanh.pop %v420
    %v649 = vtanh.pop %v579
    %v650 = vtanh.pop %v581
    %v651 = vtanh.pop %v424
    %v652 = vtanh.pop %v426
    %v653 = vtanh.pop %v585
    %v654 = vtanh.pop %v587
    %v655 = vtanh.pop %v430
    %v656 = vtanh.pop %v432
    %v657 = vtanh.pop %v591
    %v658 = vtanh.pop %v593
    %v659 = vld [vmem:[%s4] sm:$0xff]
    %v660 = vld [vmem:[%s4 + $0x8] sm:$0xff]
    %v661 = vld [vmem:[%s4 + $0x10] sm:$0xff]
    %v662 = vld [vmem:[%s4 + $0x18] sm:$0xff]
    %v663 = vld [vmem:[%s4 + $0x20] sm:$0xff]
    %v664 = vld [vmem:[%s4 + $0x28] sm:$0xff]
    %v665 = vld [vmem:[%s4 + $0x30] sm:$0xff]
    %v666 = vld [vmem:[%s4 + $0x38] sm:$0xff]
    %v667 = vld [vmem:[%s5] sm:$0xff]
    %v668 = vld [vmem:[%s5 + $0x8] sm:$0xff]
    %v669 = vld [vmem:[%s5 + $0x10] sm:$0xff]
    %v670 = vld [vmem:[%s5 + $0x18] sm:$0xff]
    %v671 = vld [vmem:[%s5 + $0x20] sm:$0xff]
    %v672 = vld [vmem:[%s5 + $0x28] sm:$0xff]
    %v673 = vld [vmem:[%s5 + $0x30] sm:$0xff]
    %v674 = vld [vmem:[%s5 + $0x38] sm:$0xff]
    %676 = vset.pattern.permute.xlu0 0
    %677 = vperm.xlu0 %676, %v667
    %v678 = vpop.permute.xlu0 %677
    %681 = vset.pattern.permute.xlu0 0
    %682 = vperm.xlu0 %681, %v668
    %v683 = vpop.permute.xlu0 %682
    %686 = vset.pattern.permute.xlu0 0
    %687 = vperm.xlu0 %686, %v669
    %v688 = vpop.permute.xlu0 %687
    %691 = vset.pattern.permute.xlu0 0
    %692 = vperm.xlu0 %691, %v670
    %v693 = vpop.permute.xlu0 %692
    %696 = vset.pattern.permute.xlu0 0
    %697 = vperm.xlu0 %696, %v671
    %v698 = vpop.permute.xlu0 %697
    %701 = vset.pattern.permute.xlu0 0
    %702 = vperm.xlu0 %701, %v672
    %v703 = vpop.permute.xlu0 %702
    %706 = vset.pattern.permute.xlu0 0
    %707 = vperm.xlu0 %706, %v673
    %v708 = vpop.permute.xlu0 %707
    %711 = vset.pattern.permute.xlu0 0
    %712 = vperm.xlu0 %711, %v674
    %v713 = vpop.permute.xlu0 %712
    %715 = vmatprep.subr.mxu0 %v596
    %716 = vmatpush1.msra.mxu0 %v595
    %717 = vmatprep.subr.mxu0 %v600
    %718 = vmatpush1.msra.mxu0 %v599
    %719 = vmatprep.subr.mxu0 %v604
    %720 = vmatpush1.msra.mxu0 %v603
    %721 = vmatprep.subr.mxu0 %v608
    %722 = vmatpush1.msra.mxu0 %v607
    %723 = vmatprep.subr.mxu0 %v612
    %724 = vmatpush1.msra.mxu0 %v611
    %725 = vmatprep.subr.mxu0 %v616
    %726 = vmatpush1.msra.mxu0 %v615
    %727 = vmatprep.subr.mxu0 %v620
    %728 = vmatpush1.msra.mxu0 %v619
    %729 = vmatprep.subr.mxu0 %v624
    %730 = vmatpush1.msra.mxu0 %v623
    %731 = vmatprep.subr.mxu0 %v628
    %732 = vmatpush1.msra.mxu0 %v627
    %733 = vmatprep.subr.mxu0 %v632
    %734 = vmatpush1.msra.mxu0 %v631
    %735 = vmatprep.subr.mxu0 %v636
    %736 = vmatpush1.msra.mxu0 %v635
    %737 = vmatprep.subr.mxu0 %v640
    %738 = vmatpush1.msra.mxu0 %v639
    %739 = vmatprep.subr.mxu0 %v644
    %740 = vmatpush1.msra.mxu0 %v643
    %741 = vmatprep.subr.mxu0 %v648
    %742 = vmatpush1.msra.mxu0 %v647
    %743 = vmatprep.subr.mxu0 %v652
    %744 = vmatpush1.msra.mxu0 %v651
    %745 = vmatprep.subr.mxu0 %v656
    %746 = vmatpush1.msra.mxu0 %v655
    %747 = vmatprep.subr.mxu0 0.0
    %748 = vmatpush1.msra.mxu0 0.0
    %749 = vmatprep.subr.mxu0 0.0
    %750 = vmatpush1.msra.mxu0 0.0
    %751 = vmatprep.subr.mxu0 0.0
    %752 = vmatpush1.msra.mxu0 0.0
    %753 = vmatprep.subr.mxu0 0.0
    %754 = vmatpush1.msra.mxu0 0.0
    %755 = vmatprep.subr.mxu0 0.0
    %756 = vmatpush1.msra.mxu0 0.0
    %757 = vmatprep.subr.mxu0 0.0
    %758 = vmatpush1.msra.mxu0 0.0
    %759 = vmatprep.subr.mxu0 0.0
    %760 = vmatpush1.msra.mxu0 0.0
    %761 = vmatprep.subr.mxu0 0.0
    %762 = vmatpush1.msra.mxu0 0.0
    %763 = vmatprep.subr.mxu0 0.0
    %764 = vmatpush1.msra.mxu0 0.0
    %765 = vmatprep.subr.mxu0 0.0
    %766 = vmatpush1.msra.mxu0 0.0
    %767 = vmatprep.subr.mxu0 0.0
    %768 = vmatpush1.msra.mxu0 0.0
    %769 = vmatprep.subr.mxu0 0.0
    %770 = vmatpush1.msra.mxu0 0.0
    %771 = vmatprep.subr.mxu0 0.0
    %772 = vmatpush1.msra.mxu0 0.0
    %773 = vmatprep.subr.mxu0 0.0
    %774 = vmatpush1.msra.mxu0 0.0
    %775 = vmatprep.subr.mxu0 0.0
    %776 = vmatpush1.msra.mxu0 0.0
    %777 = vmatprep.subr.mxu0 0.0
    %778 = vmatpush1.msra.mxu0 0.0
    %779 = vmatprep.mubr.f32.mxu0 0.0
    %780 = vmatmul.mubr.f32.gmra.mrb[0].mxu0 %v659
    %v781 = vpop.f32.mrb[0].mxu0
    %v782 = vadd.f32 %v678, %v781
    %v783 = vpop.f32.mrb[0].mxu0
    %v784 = vadd.f32 %v678, %v783
    %785 = vmatprep.mubr.f32.mxu0 0.0
    %786 = vmatmul.mubr.f32.gmra.mrb[0].mxu0 %v660
    %v787 = vpop.f32.mrb[0].mxu0
    %v788 = vadd.f32 %v683, %v787
    %v789 = vpop.f32.mrb[0].mxu0
    %v790 = vadd.f32 %v683, %v789
    %791 = vmatprep.mubr.f32.mxu0 0.0
    %792 = vmatmul.mubr.f32.gmra.mrb[0].mxu0 %v661
    %v793 = vpop.f32.mrb[0].mxu0
    %v794 = vadd.f32 %v688, %v793
    %v795 = vpop.f32.mrb[0].mxu0
    %v796 = vadd.f32 %v688, %v795
    %797 = vmatprep.mubr.f32.mxu0 0.0
    %798 = vmatmul.mubr.f32.gmra.mrb[0].mxu0 %v662
    %v799 = vpop.f32.mrb[0].mxu0
    %v800 = vadd.f32 %v693, %v799
    %v801 = vpop.f32.mrb[0].mxu0
    %v802 = vadd.f32 %v693, %v801
    %803 = vmatprep.mubr.f32.mxu0 0.0
    %804 = vmatmul.mubr.f32.gmra.mrb[0].mxu0 %v663
    %v805 = vpop.f32.mrb[0].mxu0
    %v806 = vadd.f32 %v698, %v805
    %v807 = vpop.f32.mrb[0].mxu0
    %v808 = vadd.f32 %v698, %v807
    %809 = vmatprep.mubr.f32.mxu0 0.0
    %810 = vmatmul.mubr.f32.gmra.mrb[0].mxu0 %v664
    %v811 = vpop.f32.mrb[0].mxu0
    %v812 = vadd.f32 %v703, %v811
    %v813 = vpop.f32.mrb[0].mxu0
    %v814 = vadd.f32 %v703, %v813
    %815 = vmatprep.mubr.f32.mxu0 0.0
    %816 = vmatmul.mubr.f32.gmra.mrb[0].mxu0 %v665
    %v817 = vpop.f32.mrb[0].mxu0
    %v818 = vadd.f32 %v708, %v817
    %v819 = vpop.f32.mrb[0].mxu0
    %v820 = vadd.f32 %v708, %v819
    %821 = vmatprep.mubr.f32.mxu0 0.0
    %822 = vmatmul.mubr.f32.gmra.mrb[0].mxu0 %v666
    %v823 = vpop.f32.mrb[0].mxu0
    %v824 = vadd.f32 %v713, %v823
    %v825 = vpop.f32.mrb[0].mxu0
    %v826 = vadd.f32 %v713, %v825
    %827 = vdwg.mxu0
    %828 = vmatprep.subr.mxu0 %v598
    %829 = vmatpush1.msra.mxu0 %v597
    %830 = vmatprep.subr.mxu0 %v602
    %831 = vmatpush1.msra.mxu0 %v601
    %832 = vmatprep.subr.mxu0 %v606
    %833 = vmatpush1.msra.mxu0 %v605
    %834 = vmatprep.subr.mxu0 %v610
    %835 = vmatpush1.msra.mxu0 %v609
    %836 = vmatprep.subr.mxu0 %v614
    %837 = vmatpush1.msra.mxu0 %v613
    %838 = vmatprep.subr.mxu0 %v618
    %839 = vmatpush1.msra.mxu0 %v617
    %840 = vmatprep.subr.mxu0 %v622
    %841 = vmatpush1.msra.mxu0 %v621
    %842 = vmatprep.subr.mxu0 %v626
    %843 = vmatpush1.msra.mxu0 %v625
    %844 = vmatprep.subr.mxu0 %v630
    %845 = vmatpush1.msra.mxu0 %v629
    %846 = vmatprep.subr.mxu0 %v634
    %847 = vmatpush1.msra.mxu0 %v633
    %848 = vmatprep.subr.mxu0 %v638
    %849 = vmatpush1.msra.mxu0 %v637
    %850 = vmatprep.subr.mxu0 %v642
    %851 = vmatpush1.msra.mxu0 %v641
    %852 = vmatprep.subr.mxu0 %v646
    %853 = vmatpush1.msra.mxu0 %v645
    %854 = vmatprep.subr.mxu0 %v650
    %855 = vmatpush1.msra.mxu0 %v649
    %856 = vmatprep.subr.mxu0 %v654
    %857 = vmatpush1.msra.mxu0 %v653
    %858 = vmatprep.subr.mxu0 %v658
    %859 = vmatpush1.msra.mxu0 %v657
    %860 = vmatprep.subr.mxu0 0.0
    %861 = vmatpush1.msra.mxu0 0.0
    %862 = vmatprep.subr.mxu0 0.0
    %863 = vmatpush1.msra.mxu0 0.0
    %864 = vmatprep.subr.mxu0 0.0
    %865 = vmatpush1.msra.mxu0 0.0
    %866 = vmatprep.subr.mxu0 0.0
    %867 = vmatpush1.msra.mxu0 0.0
    %868 = vmatprep.subr.mxu0 0.0
    %869 = vmatpush1.msra.mxu0 0.0
    %870 = vmatprep.subr.mxu0 0.0
    %871 = vmatpush1.msra.mxu0 0.0
    %872 = vmatprep.subr.mxu0 0.0
    %873 = vmatpush1.msra.mxu0 0.0
    %874 = vmatprep.subr.mxu0 0.0
    %875 = vmatpush1.msra.mxu0 0.0
    %876 = vmatprep.subr.mxu0 0.0
    %877 = vmatpush1.msra.mxu0 0.0
    %878 = vmatprep.subr.mxu0 0.0
    %879 = vmatpush1.msra.mxu0 0.0
    %880 = vmatprep.subr.mxu0 0.0
    %881 = vmatpush1.msra.mxu0 0.0
    %882 = vmatprep.subr.mxu0 0.0
    %883 = vmatpush1.msra.mxu0 0.0
    %884 = vmatprep.subr.mxu0 0.0
    %885 = vmatpush1.msra.mxu0 0.0
    %886 = vmatprep.subr.mxu0 0.0
    %887 = vmatpush1.msra.mxu0 0.0
    %888 = vmatprep.subr.mxu0 0.0
    %889 = vmatpush1.msra.mxu0 0.0
    %890 = vmatprep.subr.mxu0 0.0
    %891 = vmatpush1.msra.mxu0 0.0
    %892 = vmatprep.mubr.f32.mxu0 0.0
    %893 = vmatmul.mubr.f32.gmra.mrb[0].mxu0 %v659
    %v894 = vpop.f32.mrb[0].mxu0
    %v895 = vadd.f32 %v678, %v894
    %v896 = vpop.f32.mrb[0].mxu0
    %v897 = vadd.f32 %v678, %v896
    %898 = vmatprep.mubr.f32.mxu0 0.0
    %899 = vmatmul.mubr.f32.gmra.mrb[0].mxu0 %v660
    %v900 = vpop.f32.mrb[0].mxu0
    %v901 = vadd.f32 %v683, %v900
    %v902 = vpop.f32.mrb[0].mxu0
    %v903 = vadd.f32 %v683, %v902
    %904 = vmatprep.mubr.f32.mxu0 0.0
    %905 = vmatmul.mubr.f32.gmra.mrb[0].mxu0 %v661
    %v906 = vpop.f32.mrb[0].mxu0
    %v907 = vadd.f32 %v688, %v906
    %v908 = vpop.f32.mrb[0].mxu0
    %v909 = vadd.f32 %v688, %v908
    %910 = vmatprep.mubr.f32.mxu0 0.0
    %911 = vmatmul.mubr.f32.gmra.mrb[0].mxu0 %v662
    %v912 = vpop.f32.mrb[0].mxu0
    %v913 = vadd.f32 %v693, %v912
    %v914 = vpop.f32.mrb[0].mxu0
    %v915 = vadd.f32 %v693, %v914
    %916 = vmatprep.mubr.f32.mxu0 0.0
    %917 = vmatmul.mubr.f32.gmra.mrb[0].mxu0 %v663
    %v918 = vpop.f32.mrb[0].mxu0
    %v919 = vadd.f32 %v698, %v918
    %v920 = vpop.f32.mrb[0].mxu0
    %v921 = vadd.f32 %v698, %v920
    %922 = vmatprep.mubr.f32.mxu0 0.0
    %923 = vmatmul.mubr.f32.gmra.mrb[0].mxu0 %v664
    %v924 = vpop.f32.mrb[0].mxu0
    %v925 = vadd.f32 %v703, %v924
    %v926 = vpop.f32.mrb[0].mxu0
    %v927 = vadd.f32 %v703, %v926
    %928 = vmatprep.mubr.f32.mxu0 0.0
    %929 = vmatmul.mubr.f32.gmra.mrb[0].mxu0 %v665
    %v930 = vpop.f32.mrb[0].mxu0
    %v931 = vadd.f32 %v708, %v930
    %v932 = vpop.f32.mrb[0].mxu0
    %v933 = vadd.f32 %v708, %v932
    %934 = vmatprep.mubr.f32.mxu0 0.0
    %935 = vmatmul.mubr.f32.gmra.mrb[0].mxu0 %v666
    %v936 = vpop.f32.mrb[0].mxu0
    %v937 = vadd.f32 %v713, %v936
    %v938 = vpop.f32.mrb[0].mxu0
    %v939 = vadd.f32 %v713, %v938
    %940 = vdwg.mxu0
    %v941 = vtanh.pop %v782
    %v942 = vtanh.pop %v784
    %v943 = vtanh.pop %v895
    %v944 = vtanh.pop %v897
    %v945 = vtanh.pop %v788
    %v946 = vtanh.pop %v790
    %v947 = vtanh.pop %v901
    %v948 = vtanh.pop %v903
    %v949 = vtanh.pop %v794
    %v950 = vtanh.pop %v796
    %v951 = vtanh.pop %v907
    %v952 = vtanh.pop %v909
    %v953 = vtanh.pop %v800
    %v954 = vtanh.pop %v802
    %v955 = vtanh.pop %v913
    %v956 = vtanh.pop %v915
    %v957 = vtanh.pop %v806
    %v958 = vtanh.pop %v808
    %v959 = vtanh.pop %v919
    %v960 = vtanh.pop %v921
    %v961 = vtanh.pop %v812
    %v962 = vtanh.pop %v814
    %v963 = vtanh.pop %v925
    %v964 = vtanh.pop %v927
    %v965 = vtanh.pop %v818
    %v966 = vtanh.pop %v820
    %v967 = vtanh.pop %v931
    %v968 = vtanh.pop %v933
    %v969 = vtanh.pop %v824
    %v970 = vtanh.pop %v826
    %v971 = vtanh.pop %v937
    %v972 = vtanh.pop %v939
    %v973 = vld [vmem:[%s6] sm:$0xff]
    %v974 = vld [vmem:[%s6 + $0x8] sm:$0xff]
    %v975 = vld [vmem:[%s7] sm:$0xff]
    %v976 = vld [vmem:[%s7 + $0x8] sm:$0xff]
    %978 = vset.pattern.permute.xlu0 0
    %979 = vperm.xlu0 %978, %v975
    %v980 = vpop.permute.xlu0 %979
    %983 = vset.pattern.permute.xlu0 0
    %984 = vperm.xlu0 %983, %v976
    %v985 = vpop.permute.xlu0 %984
    %vm987 = vcmask 523264
    %v989 = vsel %vm987, %v973, 0
    %v992 = vsel %vm987, %v974, 0
    %994 = vmatprep.subr.mxu0 %v942
    %995 = vmatpush1.msra.mxu0 %v941
    %996 = vmatprep.subr.mxu0 %v946
    %997 = vmatpush1.msra.mxu0 %v945
    %998 = vmatprep.subr.mxu0 %v950
    %999 = vmatpush1.msra.mxu0 %v949
    %1000 = vmatprep.subr.mxu0 %v954
    %1001 = vmatpush1.msra.mxu0 %v953
    %1002 = vmatprep.subr.mxu0 %v958
    %1003 = vmatpush1.msra.mxu0 %v957
    %1004 = vmatprep.subr.mxu0 %v962
    %1005 = vmatpush1.msra.mxu0 %v961
    %1006 = vmatprep.subr.mxu0 %v966
    %1007 = vmatpush1.msra.mxu0 %v965
    %1008 = vmatprep.subr.mxu0 %v970
    %1009 = vmatpush1.msra.mxu0 %v969
    %1010 = vmatprep.subr.mxu0 0.0
    %1011 = vmatpush1.msra.mxu0 0.0
    %1012 = vmatprep.subr.mxu0 0.0
    %1013 = vmatpush1.msra.mxu0 0.0
    %1014 = vmatprep.subr.mxu0 0.0
    %1015 = vmatpush1.msra.mxu0 0.0
    %1016 = vmatprep.subr.mxu0 0.0
    %1017 = vmatpush1.msra.mxu0 0.0
    %1018 = vmatprep.subr.mxu0 0.0
    %1019 = vmatpush1.msra.mxu0 0.0
    %1020 = vmatprep.subr.mxu0 0.0
    %1021 = vmatpush1.msra.mxu0 0.0
    %1022 = vmatprep.subr.mxu0 0.0
    %1023 = vmatpush1.msra.mxu0 0.0
    %1024 = vmatprep.subr.mxu0 0.0
    %1025 = vmatpush1.msra.mxu0 0.0
    %1026 = vmatprep.subr.mxu0 0.0
    %1027 = vmatpush1.msra.mxu0 0.0
    %1028 = vmatprep.subr.mxu0 0.0
    %1029 = vmatpush1.msra.mxu0 0.0
    %1030 = vmatprep.subr.mxu0 0.0
    %1031 = vmatpush1.msra.mxu0 0.0
    %1032 = vmatprep.subr.mxu0 0.0
    %1033 = vmatpush1.msra.mxu0 0.0
    %1034 = vmatprep.subr.mxu0 0.0
    %1035 = vmatpush1.msra.mxu0 0.0
    %1036 = vmatprep.subr.mxu0 0.0
    %1037 = vmatpush1.msra.mxu0 0.0
    %1038 = vmatprep.subr.mxu0 0.0
    %1039 = vmatpush1.msra.mxu0 0.0
    %1040 = vmatprep.subr.mxu0 0.0
    %1041 = vmatpush1.msra.mxu0 0.0
    %1042 = vmatprep.subr.mxu0 0.0
    %1043 = vmatpush1.msra.mxu0 0.0
    %1044 = vmatprep.subr.mxu0 0.0
    %1045 = vmatpush1.msra.mxu0 0.0
    %1046 = vmatprep.subr.mxu0 0.0
    %1047 = vmatpush1.msra.mxu0 0.0
    %1048 = vmatprep.subr.mxu0 0.0
    %1049 = vmatpush1.msra.mxu0 0.0
    %1050 = vmatprep.subr.mxu0 0.0
    %1051 = vmatpush1.msra.mxu0 0.0
    %1052 = vmatprep.subr.mxu0 0.0
    %1053 = vmatpush1.msra.mxu0 0.0
    %1054 = vmatprep.subr.mxu0 0.0
    %1055 = vmatpush1.msra.mxu0 0.0
    %1056 = vmatprep.subr.mxu0 0.0
    %1057 = vmatpush1.msra.mxu0 0.0
    %1058 = vmatprep.mubr.f32.mxu0 0.0
    %1059 = vmatmul.mubr.f32.gmra.mrb[0].mxu0 %v989
    %v1060 = vpop.f32.mrb[0].mxu0
    %v1061 = vadd.f32 %v980, %v1060
    %v1062 = vpop.f32.mrb[0].mxu0
    %v1063 = vadd.f32 %v980, %v1062
    %1064 = vmatprep.mubr.f32.mxu0 0.0
    %1065 = vmatmul.mubr.f32.gmra.mrb[0].mxu0 %v992
    %v1066 = vpop.f32.mrb[0].mxu0
    %v1067 = vadd.f32 %v985, %v1066
    %v1068 = vpop.f32.mrb[0].mxu0
    %v1069 = vadd.f32 %v985, %v1068
    %1070 = vdwg.mxu0
    %1071 = vmatprep.subr.mxu0 %v944
    %1072 = vmatpush1.msra.mxu0 %v943
    %1073 = vmatprep.subr.mxu0 %v948
    %1074 = vmatpush1.msra.mxu0 %v947
    %1075 = vmatprep.subr.mxu0 %v952
    %1076 = vmatpush1.msra.mxu0 %v951
    %1077 = vmatprep.subr.mxu0 %v956
    %1078 = vmatpush1.msra.mxu0 %v955
    %1079 = vmatprep.subr.mxu0 %v960
    %1080 = vmatpush1.msra.mxu0 %v959
    %1081 = vmatprep.subr.mxu0 %v964
    %1082 = vmatpush1.msra.mxu0 %v963
    %1083 = vmatprep.subr.mxu0 %v968
    %1084 = vmatpush1.msra.mxu0 %v967
    %1085 = vmatprep.subr.mxu0 %v972
    %1086 = vmatpush1.msra.mxu0 %v971
    %1087 = vmatprep.subr.mxu0 0.0
    %1088 = vmatpush1.msra.mxu0 0.0
    %1089 = vmatprep.subr.mxu0 0.0
    %1090 = vmatpush1.msra.mxu0 0.0
    %1091 = vmatprep.subr.mxu0 0.0
    %1092 = vmatpush1.msra.mxu0 0.0
    %1093 = vmatprep.subr.mxu0 0.0
    %1094 = vmatpush1.msra.mxu0 0.0
    %1095 = vmatprep.subr.mxu0 0.0
    %1096 = vmatpush1.msra.mxu0 0.0
    %1097 = vmatprep.subr.mxu0 0.0
    %1098 = vmatpush1.msra.mxu0 0.0
    %1099 = vmatprep.subr.mxu0 0.0
    %1100 = vmatpush1.msra.mxu0 0.0
    %1101 = vmatprep.subr.mxu0 0.0
    %1102 = vmatpush1.msra.mxu0 0.0
    %1103 = vmatprep.subr.mxu0 0.0
    %1104 = vmatpush1.msra.mxu0 0.0
    %1105 = vmatprep.subr.mxu0 0.0
    %1106 = vmatpush1.msra.mxu0 0.0
    %1107 = vmatprep.subr.mxu0 0.0
    %1108 = vmatpush1.msra.mxu0 0.0
    %1109 = vmatprep.subr.mxu0 0.0
    %1110 = vmatpush1.msra.mxu0 0.0
    %1111 = vmatprep.subr.mxu0 0.0
    %1112 = vmatpush1.msra.mxu0 0.0
    %1113 = vmatprep.subr.mxu0 0.0
    %1114 = vmatpush1.msra.mxu0 0.0
    %1115 = vmatprep.subr.mxu0 0.0
    %1116 = vmatpush1.msra.mxu0 0.0
    %1117 = vmatprep.subr.mxu0 0.0
    %1118 = vmatpush1.msra.mxu0 0.0
    %1119 = vmatprep.subr.mxu0 0.0
    %1120 = vmatpush1.msra.mxu0 0.0
    %1121 = vmatprep.subr.mxu0 0.0
    %1122 = vmatpush1.msra.mxu0 0.0
    %1123 = vmatprep.subr.mxu0 0.0
    %1124 = vmatpush1.msra.mxu0 0.0
    %1125 = vmatprep.subr.mxu0 0.0
    %1126 = vmatpush1.msra.mxu0 0.0
    %1127 = vmatprep.subr.mxu0 0.0
    %1128 = vmatpush1.msra.mxu0 0.0
    %1129 = vmatprep.subr.mxu0 0.0
    %1130 = vmatpush1.msra.mxu0 0.0
    %1131 = vmatprep.subr.mxu0 0.0
    %1132 = vmatpush1.msra.mxu0 0.0
    %1133 = vmatprep.subr.mxu0 0.0
    %1134 = vmatpush1.msra.mxu0 0.0
    %1135 = vmatprep.mubr.f32.mxu0 0.0
    %1136 = vmatmul.mubr.f32.gmra.mrb[0].mxu0 %v989
    %v1137 = vpop.f32.mrb[0].mxu0
    %v1138 = vadd.f32 %v980, %v1137
    %v1139 = vpop.f32.mrb[0].mxu0
    %v1140 = vadd.f32 %v980, %v1139
    %1141 = vmatprep.mubr.f32.mxu0 0.0
    %1142 = vmatmul.mubr.f32.gmra.mrb[0].mxu0 %v992
    %v1143 = vpop.f32.mrb[0].mxu0
    %v1144 = vadd.f32 %v985, %v1143
    %v1145 = vpop.f32.mrb[0].mxu0
    %v1146 = vadd.f32 %v985, %v1145
    %1147 = vdwg.mxu0
    %v1148 = vtanh.pop %v1061
    %v1149 = vtanh.pop %v1063
    %v1150 = vtanh.pop %v1138
    %v1151 = vtanh.pop %v1140
    %v1152 = vtanh.pop %v1067
    %v1153 = vtanh.pop %v1069
    %v1154 = vtanh.pop %v1144
    %v1155 = vtanh.pop %v1146
    %v1156 = vld [vmem:[%s8] sm:$0xff]
    %v1157 = vld [vmem:[%s8 + $0x8] sm:$0xff]
    %1159 = vset.pattern.permute.xlu0 0
    %1160 = vperm.xlu0 %1159, %v1156
    %v1161 = vpop.permute.xlu0 %1160
    %1164 = vset.pattern.permute.xlu0 0
    %1165 = vperm.xlu0 %1164, %v1157
    %v1166 = vpop.permute.xlu0 %1165
    %v1168 = vmul.f32 %v1148, %v1161
    %v1169 = vmul.f32 %v1149, %v1161
    %v1170 = vmul.f32 %v1150, %v1161
    %v1171 = vmul.f32 %v1151, %v1161
    %v1172 = vmul.f32 %v1152, %v1166
    %v1173 = vmul.f32 %v1153, %v1166
    %v1174 = vmul.f32 %v1154, %v1166
    %v1175 = vmul.f32 %v1155, %v1166
    %v1176 = vadd.f32 %v1168, %v1172
    %v1177 = vrot.slane %v1176, 4
    %v1178 = vadd.f32 %v1176, %v1177
    %v1179 = vrot.slane %v1178, 2
    %v1180 = vadd.f32 %v1178, %v1179
    %v1181 = vrot.slane %v1180, 1
    %v1182 = vadd.f32 %v1180, %v1181
    %v1183 = vadd.f32 %v1169, %v1173
    %v1184 = vrot.slane %v1183, 4
    %v1185 = vadd.f32 %v1183, %v1184
    %v1186 = vrot.slane %v1185, 2
    %v1187 = vadd.f32 %v1185, %v1186
    %v1188 = vrot.slane %v1187, 1
    %v1189 = vadd.f32 %v1187, %v1188
    %v1190 = vadd.f32 %v1170, %v1174
    %v1191 = vrot.slane %v1190, 4
    %v1192 = vadd.f32 %v1190, %v1191
    %v1193 = vrot.slane %v1192, 2
    %v1194 = vadd.f32 %v1192, %v1193
    %v1195 = vrot.slane %v1194, 1
    %v1196 = vadd.f32 %v1194, %v1195
    %v1197 = vadd.f32 %v1171, %v1175
    %v1198 = vrot.slane %v1197, 4
    %v1199 = vadd.f32 %v1197, %v1198
    %v1200 = vrot.slane %v1199, 2
    %v1201 = vadd.f32 %v1199, %v1200
    %v1202 = vrot.slane %v1201, 1
    %v1203 = vadd.f32 %v1201, %v1202
    %v1204 = vld [vmem:[#allocation5] sm:$0x1]
    %1206 = vset.pattern.permute.xlu0 0
    %1207 = vperm.xlu0 %1206, %v1204
    %v1208 = vpop.permute.xlu0 %1207
    %v1210 = vlaneseq
    %v1211 = vshrl.u32 %v1210, 7
    %v1212 = vsub.s32 0, %v1211
    %v1213 = vrot.slane %v1208, %v1212
    %v1214 = vadd.f32 %v1182, %v1213
    %v1215 = vadd.f32 %v1189, %v1213
    %v1216 = vadd.f32 %v1196, %v1213
    %v1217 = vadd.f32 %v1203, %v1213
    %v1218 = vand.u32 2147483647, %v1156
    %v1219 = vand.u32 2147483647, %v1157
    %vm1220 = vcmask 7168
    %v1221 = vsel %vm1220, %v1218, 0.0
    %v1222 = vsel %vm1220, %v1219, 0.0
    %v1223 = vadd.f32 %v1221, %v1222
    %1224 = vadd.xlane.f32.xlu0 %v1223
    %v1225 = vpop.xlane.xlu0 %1224
    %v1226 = vrot.slane %v1225, 4
    %v1227 = vadd.f32 %v1225, %v1226
    %v1228 = vrot.slane %v1227, 2
    %v1229 = vadd.f32 %v1227, %v1228
    %v1230 = vrot.slane %v1229, 1
    %v1231 = vadd.f32 %v1229, %v1230
    %s1232 = vtos %v1231
    %v1233 = vand.u32 2147483647, %v1204
    %v1234 = vadd.f32 %v1233, 0.0
    %s1235 = vtos %v1234
    %s1236 = sadd.f32 %s1232, %s1235
    %v1237 = vlaneseq
    %v1238 = vand.u32 %v1237, 127
    %v1239 = vadd.s32 %v1238, 128
    %v1240 = vadd.s32 %v1238, 256
    %v1241 = vadd.s32 %v1238, 384
    %s1242 = smul.u32 0, 512
    %v1243 = vstv %s1242
    %v1244 = vadd.s32 %v1238, %v1243
    %v1245 = vadd.s32 %v1239, %v1243
    %v1246 = vadd.s32 %v1240, %v1243
    %v1247 = vadd.s32 %v1241, %v1243
    %vm1248 = vcmp.lt.s32.totalorder %v1244, 24
    %vm1249 = vcmp.lt.s32.totalorder %v1245, 24
    %vm1250 = vcmp.lt.s32.totalorder %v1246, 24
    %vm1251 = vcmp.lt.s32.totalorder %v1247, 24
    %v1252 = vstv %s1236
    %v1253 = vsub.f32 %v1214, %v1252
    %v1254 = vsub.f32 %v1215, %v1252
    %v1255 = vsub.f32 %v1216, %v1252
    %v1256 = vsub.f32 %v1217, %v1252
    %v1257 = vsel %vm1248, %v1253, -1e+30
    %v1258 = vsel %vm1249, %v1254, -1e+30
    %v1259 = vsel %vm1250, %v1255, -1e+30
    %v1260 = vsel %vm1251, %v1256, -1e+30
    %v1261 = vmul.f32 %v1257, 1.442695
    %v1262 = vpow.pop %v1261
    %v1263 = vmul.f32 %v1258, 1.442695
    %v1264 = vpow.pop %v1263
    %v1265 = vmul.f32 %v1259, 1.442695
    %v1266 = vpow.pop %v1265
    %v1267 = vmul.f32 %v1260, 1.442695
    %v1268 = vpow.pop %v1267
    %v1273 = vcombine.low %v1262, %v1264
    %v1274 = vcombine.low %v1266, %v1268
    %v1276 = vunpack.c.l.s4 1966171168
    %v1277 = vunpack.c.0.s8 %v1276
    %v1278 = vlaneseq
    %v1279 = vshrl.u32 %v1278, 7
    %v1280 = vsub.s32 %v1277, %v1279
    %v1281 = vrot.slane %v1273, %v1280
    %v1283 = vunpack.c.l.s4 1966171168
    %v1284 = vunpack.c.0.s8 %v1283
    %v1285 = vlaneseq
    %v1286 = vshrl.u32 %v1285, 7
    %v1287 = vsub.s32 %v1284, %v1286
    %v1288 = vrot.slane %v1274, %v1287
    %v1289 = vcombine.low %v1281, %v1288
    %v1291 = vunpack.c.l.s4 1966171168
    %v1292 = vunpack.c.0.s8 %v1291
    %v1293 = vlaneseq
    %v1294 = vshrl.u32 %v1293, 7
    %v1295 = vsub.s32 %v1292, %v1294
    %v1296 = vrot.slane %v1289, %v1295
    %v1298 = vlaneseq
    %vm1299 = vcmp.ge.s32.totalorder %v1298, 0
    %vm1300 = vcmp.lt.s32.totalorder %v1298, 512
    %vm1301 = vmand %vm1299, %vm1300
    %s1302 = smul.u32 0, 4
    %s1303 = smul.u32 %s1302, 8
    %s1304 = sadd.s32 %s1303, 0
    %s1305 = scalar_lea.vmem [#allocation7], %s1304
    %1306 = vst.msk [vmem:[%s1305] ss:$8 sm:$0xf] %vm1301, %v1296
    %1307 = vst.msk [vmem:[%s1305] ss:$8 sm:$0x0] %vm1301, %v1296
    %s1308 = sld [smem:[#allocation4]]
    %vm1309 = vcmp.gt.s32.totalorder %v1244, 4294967295
    %vm1310 = vcmp.gt.s32.totalorder %v1245, 4294967295
    %vm1311 = vcmp.gt.s32.totalorder %v1246, 4294967295
    %vm1312 = vcmp.gt.s32.totalorder %v1247, 4294967295
    %v1313 = vstv %s1308
    %vm1314 = vcmp.le.s32.totalorder %v1244, %v1313
    %vm1315 = vcmp.le.s32.totalorder %v1245, %v1313
    %vm1316 = vcmp.le.s32.totalorder %v1246, %v1313
    %vm1317 = vcmp.le.s32.totalorder %v1247, %v1313
    %vm1318 = vmand %vm1309, %vm1314
    %vm1319 = vmand %vm1310, %vm1315
    %vm1320 = vmand %vm1311, %vm1316
    %vm1321 = vmand %vm1312, %vm1317
    %v1322 = vld [vmem:[#allocation2] ss:$8 sm:$0xf]
    %v1323 = vsel %vm1318, %v1262, 0.0
    %v1324 = vsel %vm1319, %v1264, 0.0
    %v1325 = vsel %vm1320, %v1266, 0.0
    %v1326 = vsel %vm1321, %v1268, 0.0
    %v1331 = vcombine.low %v1323, %v1324
    %v1332 = vcombine.low %v1325, %v1326
    %v1334 = vunpack.c.l.s4 1966171168
    %v1335 = vunpack.c.0.s8 %v1334
    %v1336 = vlaneseq
    %v1337 = vshrl.u32 %v1336, 7
    %v1338 = vsub.s32 %v1335, %v1337
    %v1339 = vrot.slane %v1331, %v1338
    %v1341 = vunpack.c.l.s4 1966171168
    %v1342 = vunpack.c.0.s8 %v1341
    %v1343 = vlaneseq
    %v1344 = vshrl.u32 %v1343, 7
    %v1345 = vsub.s32 %v1342, %v1344
    %v1346 = vrot.slane %v1332, %v1345
    %v1347 = vcombine.low %v1339, %v1346
    %v1349 = vunpack.c.l.s4 1966171168
    %v1350 = vunpack.c.0.s8 %v1349
    %v1351 = vlaneseq
    %v1352 = vshrl.u32 %v1351, 7
    %v1353 = vsub.s32 %v1350, %v1352
    %v1354 = vrot.slane %v1347, %v1353
    %v1356 = vadd.f32 %v1322, %v1354
    %1357 = vst.msk [vmem:[#allocation2] ss:$8 sm:$0xf] %vm1301, %v1356
    %1358 = vst.msk [vmem:[#allocation2] ss:$8 sm:$0x0] %vm1301, %v1356
    %s1359 = sld [smem:[#allocation4 + $0x1]]
    %vm1360 = vcmp.gt.s32.totalorder %v1244, %v1313
    %vm1361 = vcmp.gt.s32.totalorder %v1245, %v1313
    %vm1362 = vcmp.gt.s32.totalorder %v1246, %v1313
    %vm1363 = vcmp.gt.s32.totalorder %v1247, %v1313
    %v1364 = vstv %s1359
    %vm1365 = vcmp.le.s32.totalorder %v1244, %v1364
    %vm1366 = vcmp.le.s32.totalorder %v1245, %v1364
    %vm1367 = vcmp.le.s32.totalorder %v1246, %v1364
    %vm1368 = vcmp.le.s32.totalorder %v1247, %v1364
    %vm1369 = vmand %vm1360, %vm1365
    %vm1370 = vmand %vm1361, %vm1366
    %vm1371 = vmand %vm1362, %vm1367
    %vm1372 = vmand %vm1363, %vm1368
    %s1373 = scalar_lea.vmem [#allocation2], 1
    %v1374 = vld [vmem:[%s1373] ss:$8 sm:$0xf]
    %v1375 = vsel %vm1369, %v1262, 0.0
    %v1376 = vsel %vm1370, %v1264, 0.0
    %v1377 = vsel %vm1371, %v1266, 0.0
    %v1378 = vsel %vm1372, %v1268, 0.0
    %v1383 = vcombine.low %v1375, %v1376
    %v1384 = vcombine.low %v1377, %v1378
    %v1386 = vunpack.c.l.s4 1966171168
    %v1387 = vunpack.c.0.s8 %v1386
    %v1388 = vlaneseq
    %v1389 = vshrl.u32 %v1388, 7
    %v1390 = vsub.s32 %v1387, %v1389
    %v1391 = vrot.slane %v1383, %v1390
    %v1393 = vunpack.c.l.s4 1966171168
    %v1394 = vunpack.c.0.s8 %v1393
    %v1395 = vlaneseq
    %v1396 = vshrl.u32 %v1395, 7
    %v1397 = vsub.s32 %v1394, %v1396
    %v1398 = vrot.slane %v1384, %v1397
    %v1399 = vcombine.low %v1391, %v1398
    %v1401 = vunpack.c.l.s4 1966171168
    %v1402 = vunpack.c.0.s8 %v1401
    %v1403 = vlaneseq
    %v1404 = vshrl.u32 %v1403, 7
    %v1405 = vsub.s32 %v1402, %v1404
    %v1406 = vrot.slane %v1399, %v1405
    %v1408 = vadd.f32 %v1374, %v1406
    %1409 = vst.msk [vmem:[%s1373] ss:$8 sm:$0xf] %vm1301, %v1408
    %1410 = vst.msk [vmem:[%s1373] ss:$8 sm:$0x0] %vm1301, %v1408
    %s1411 = sld [smem:[#allocation4 + $0x2]]
    %vm1412 = vcmp.gt.s32.totalorder %v1244, %v1364
    %vm1413 = vcmp.gt.s32.totalorder %v1245, %v1364
    %vm1414 = vcmp.gt.s32.totalorder %v1246, %v1364
    %vm1415 = vcmp.gt.s32.totalorder %v1247, %v1364
    %v1416 = vstv %s1411
    %vm1417 = vcmp.le.s32.totalorder %v1244, %v1416
    %vm1418 = vcmp.le.s32.totalorder %v1245, %v1416
    %vm1419 = vcmp.le.s32.totalorder %v1246, %v1416
    %vm1420 = vcmp.le.s32.totalorder %v1247, %v1416
    %vm1421 = vmand %vm1412, %vm1417
    %vm1422 = vmand %vm1413, %vm1418
    %vm1423 = vmand %vm1414, %vm1419
    %vm1424 = vmand %vm1415, %vm1420
    %s1425 = scalar_lea.vmem [#allocation2], 2
    %v1426 = vld [vmem:[%s1425] ss:$8 sm:$0xf]
    %v1427 = vsel %vm1421, %v1262, 0.0
    %v1428 = vsel %vm1422, %v1264, 0.0
    %v1429 = vsel %vm1423, %v1266, 0.0
    %v1430 = vsel %vm1424, %v1268, 0.0
    %v1435 = vcombine.low %v1427, %v1428
    %v1436 = vcombine.low %v1429, %v1430
    %v1438 = vunpack.c.l.s4 1966171168
    %v1439 = vunpack.c.0.s8 %v1438
    %v1440 = vlaneseq
    %v1441 = vshrl.u32 %v1440, 7
    %v1442 = vsub.s32 %v1439, %v1441
    %v1443 = vrot.slane %v1435, %v1442
    %v1445 = vunpack.c.l.s4 1966171168
    %v1446 = vunpack.c.0.s8 %v1445
    %v1447 = vlaneseq
    %v1448 = vshrl.u32 %v1447, 7
    %v1449 = vsub.s32 %v1446, %v1448
    %v1450 = vrot.slane %v1436, %v1449
    %v1451 = vcombine.low %v1443, %v1450
    %v1453 = vunpack.c.l.s4 1966171168
    %v1454 = vunpack.c.0.s8 %v1453
    %v1455 = vlaneseq
    %v1456 = vshrl.u32 %v1455, 7
    %v1457 = vsub.s32 %v1454, %v1456
    %v1458 = vrot.slane %v1451, %v1457
    %v1460 = vadd.f32 %v1426, %v1458
    %1461 = vst.msk [vmem:[%s1425] ss:$8 sm:$0xf] %vm1301, %v1460
    %1462 = vst.msk [vmem:[%s1425] ss:$8 sm:$0x0] %vm1301, %v1460
    // Predicated region
    $region80: #{tpu_custom_call.1} parent=1 // pred_check
      %p1463 = pneg %p88
    $region81: #{tpu_custom_call.1} parent=1 // pred_check_branch
      %1465 = sbr.rel (%p1463) target = $region83
    $region82: #{tpu_custom_call.1} parent=1 // pred_region
      %v1466 = vld [vmem:[#allocation2] ss:$8 sm:$0xf]
      %v1468 = vlaneseq
      %v1469 = vshrl.u32 %v1468, 7
      %v1470 = vsub.s32 0, %v1469
      %v1471 = vrot.slane %v1466, %v1470
      %v1472 = vlaneseq
      %v1473 = vshrl.u32 %v1472, 7
      %v1474 = vsub.s32 1, %v1473
      %v1475 = vrot.slane %v1466, %v1474
      %v1476 = vlaneseq
      %v1477 = vshrl.u32 %v1476, 7
      %v1478 = vsub.s32 2, %v1477
      %v1479 = vrot.slane %v1466, %v1478
      %v1480 = vlaneseq
      %v1481 = vshrl.u32 %v1480, 7
      %v1482 = vsub.s32 3, %v1481
      %v1483 = vrot.slane %v1466, %v1482
      %vm1488 = vcmask 1040384
      %v1489 = vsel %vm1488, %v1471, 0.0
      %v1490 = vsel %vm1488, %v1475, 0.0
      %v1491 = vadd.f32 %v1489, %v1490
      %v1492 = vsel %vm1488, %v1479, 0.0
      %v1493 = vadd.f32 %v1491, %v1492
      %v1494 = vsel %vm1488, %v1483, 0.0
      %v1495 = vadd.f32 %v1493, %v1494
      %1496 = vadd.xlane.f32.xlu0 %v1495
      %v1497 = vpop.xlane.xlu0 %1496
      %v1498 = vrot.slane %v1497, 4
      %v1499 = vadd.f32 %v1497, %v1498
      %v1500 = vrot.slane %v1499, 2
      %v1501 = vadd.f32 %v1499, %v1500
      %v1502 = vrot.slane %v1501, 1
      %v1503 = vadd.f32 %v1501, %v1502
      %s1504 = vtos %v1503
      %v1505 = vld [vmem:[%s1373] ss:$8 sm:$0xf]
      %v1507 = vlaneseq
      %v1508 = vshrl.u32 %v1507, 7
      %v1509 = vsub.s32 0, %v1508
      %v1510 = vrot.slane %v1505, %v1509
      %v1511 = vlaneseq
      %v1512 = vshrl.u32 %v1511, 7
      %v1513 = vsub.s32 1, %v1512
      %v1514 = vrot.slane %v1505, %v1513
      %v1515 = vlaneseq
      %v1516 = vshrl.u32 %v1515, 7
      %v1517 = vsub.s32 2, %v1516
      %v1518 = vrot.slane %v1505, %v1517
      %v1519 = vlaneseq
      %v1520 = vshrl.u32 %v1519, 7
      %v1521 = vsub.s32 3, %v1520
      %v1522 = vrot.slane %v1505, %v1521
      %v1527 = vsel %vm1488, %v1510, 0.0
      %v1528 = vsel %vm1488, %v1514, 0.0
      %v1529 = vadd.f32 %v1527, %v1528
      %v1530 = vsel %vm1488, %v1518, 0.0
      %v1531 = vadd.f32 %v1529, %v1530
      %v1532 = vsel %vm1488, %v1522, 0.0
      %v1533 = vadd.f32 %v1531, %v1532
      %1534 = vadd.xlane.f32.xlu0 %v1533
      %v1535 = vpop.xlane.xlu0 %1534
      %v1536 = vrot.slane %v1535, 4
      %v1537 = vadd.f32 %v1535, %v1536
      %v1538 = vrot.slane %v1537, 2
      %v1539 = vadd.f32 %v1537, %v1538
      %v1540 = vrot.slane %v1539, 1
      %v1541 = vadd.f32 %v1539, %v1540
      %s1542 = vtos %v1541
      %v1543 = vld [vmem:[%s1425] ss:$8 sm:$0xf]
      %v1545 = vlaneseq
      %v1546 = vshrl.u32 %v1545, 7
      %v1547 = vsub.s32 0, %v1546
      %v1548 = vrot.slane %v1543, %v1547
      %v1549 = vlaneseq
      %v1550 = vshrl.u32 %v1549, 7
      %v1551 = vsub.s32 1, %v1550
      %v1552 = vrot.slane %v1543, %v1551
      %v1553 = vlaneseq
      %v1554 = vshrl.u32 %v1553, 7
      %v1555 = vsub.s32 2, %v1554
      %v1556 = vrot.slane %v1543, %v1555
      %v1557 = vlaneseq
      %v1558 = vshrl.u32 %v1557, 7
      %v1559 = vsub.s32 3, %v1558
      %v1560 = vrot.slane %v1543, %v1559
      %v1565 = vsel %vm1488, %v1548, 0.0
      %v1566 = vsel %vm1488, %v1552, 0.0
      %v1567 = vadd.f32 %v1565, %v1566
      %v1568 = vsel %vm1488, %v1556, 0.0
      %v1569 = vadd.f32 %v1567, %v1568
      %v1570 = vsel %vm1488, %v1560, 0.0
      %v1571 = vadd.f32 %v1569, %v1570
      %1572 = vadd.xlane.f32.xlu0 %v1571
      %v1573 = vpop.xlane.xlu0 %1572
      %v1574 = vrot.slane %v1573, 4
      %v1575 = vadd.f32 %v1573, %v1574
      %v1576 = vrot.slane %v1575, 2
      %v1577 = vadd.f32 %v1575, %v1576
      %v1578 = vrot.slane %v1577, 1
      %v1579 = vadd.f32 %v1577, %v1578
      %s1580 = vtos %v1579
      %1581 = vst [vmem:[#allocation7] sm:$0xfe] 0.0
      %1582 = vst [vmem:[#allocation7 + $0x8] sm:$0xfe] 0.0
      %1583 = vst [vmem:[#allocation7 + $0x10] sm:$0xfe] 0.0
      %1584 = vst [vmem:[#allocation7 + $0x18] sm:$0xfe] 0.0
      %v1585 = vlaneseq
      %v1586 = vshrl.u32 %v1585, 7
      %v1587 = vmul.u32 %v1586, 512
      %v1588 = vadd.s32 %v1587, %v1238
      %v1589 = vadd.s32 %v1587, %v1239
      %v1590 = vadd.s32 %v1587, %v1240
      %v1591 = vadd.s32 %v1587, %v1241
      %s1592 = smul.u32 0, 512
      %v1593 = vstv %s1592
      %v1594 = vadd.s32 %v1588, %v1593
      %v1595 = vadd.s32 %v1589, %v1593
      %v1596 = vadd.s32 %v1590, %v1593
      %v1597 = vadd.s32 %v1591, %v1593
      %s1598 = sld [smem:[#allocation4]]
      %vm1599 = vcmp.gt.s32.totalorder %v1594, 4294967295
      %vm1600 = vcmp.gt.s32.totalorder %v1595, 4294967295
      %vm1601 = vcmp.gt.s32.totalorder %v1596, 4294967295
      %vm1602 = vcmp.gt.s32.totalorder %v1597, 4294967295
      %v1603 = vstv %s1598
      %vm1604 = vcmp.le.s32.totalorder %v1594, %v1603
      %vm1605 = vcmp.le.s32.totalorder %v1595, %v1603
      %vm1606 = vcmp.le.s32.totalorder %v1596, %v1603
      %vm1607 = vcmp.le.s32.totalorder %v1597, %v1603
      %vm1608 = vmand %vm1599, %vm1604
      %vm1609 = vmand %vm1600, %vm1605
      %vm1610 = vmand %vm1601, %vm1606
      %vm1611 = vmand %vm1602, %vm1607
      %v1612 = vstv %s1504
      %v1613 = vsel %vm1608, %v1612, 1.0
      %v1614 = vsel %vm1609, %v1612, 1.0
      %v1615 = vsel %vm1610, %v1612, 1.0
      %v1616 = vsel %vm1611, %v1612, 1.0
      %s1617 = sld [smem:[#allocation4 + $0x1]]
      %vm1618 = vcmp.gt.s32.totalorder %v1594, %v1603
      %vm1619 = vcmp.gt.s32.totalorder %v1595, %v1603
      %vm1620 = vcmp.gt.s32.totalorder %v1596, %v1603
      %vm1621 = vcmp.gt.s32.totalorder %v1597, %v1603
      %v1622 = vstv %s1617
      %vm1623 = vcmp.le.s32.totalorder %v1594, %v1622
      %vm1624 = vcmp.le.s32.totalorder %v1595, %v1622
      %vm1625 = vcmp.le.s32.totalorder %v1596, %v1622
      %vm1626 = vcmp.le.s32.totalorder %v1597, %v1622
      %vm1627 = vmand %vm1618, %vm1623
      %vm1628 = vmand %vm1619, %vm1624
      %vm1629 = vmand %vm1620, %vm1625
      %vm1630 = vmand %vm1621, %vm1626
      %v1631 = vstv %s1542
      %v1632 = vsel %vm1627, %v1631, %v1613
      %v1633 = vsel %vm1628, %v1631, %v1614
      %v1634 = vsel %vm1629, %v1631, %v1615
      %v1635 = vsel %vm1630, %v1631, %v1616
      %s1636 = sld [smem:[#allocation4 + $0x2]]
      %vm1637 = vcmp.gt.s32.totalorder %v1594, %v1622
      %vm1638 = vcmp.gt.s32.totalorder %v1595, %v1622
      %vm1639 = vcmp.gt.s32.totalorder %v1596, %v1622
      %vm1640 = vcmp.gt.s32.totalorder %v1597, %v1622
      %v1641 = vstv %s1636
      %vm1642 = vcmp.le.s32.totalorder %v1594, %v1641
      %vm1643 = vcmp.le.s32.totalorder %v1595, %v1641
      %vm1644 = vcmp.le.s32.totalorder %v1596, %v1641
      %vm1645 = vcmp.le.s32.totalorder %v1597, %v1641
      %vm1646 = vmand %vm1637, %vm1642
      %vm1647 = vmand %vm1638, %vm1643
      %vm1648 = vmand %vm1639, %vm1644
      %vm1649 = vmand %vm1640, %vm1645
      %v1650 = vstv %s1580
      %v1651 = vsel %vm1646, %v1650, %v1632
      %v1652 = vsel %vm1647, %v1650, %v1633
      %v1653 = vsel %vm1648, %v1650, %v1634
      %v1654 = vsel %vm1649, %v1650, %v1635
      %vm1655 = vcmp.gt.f32.partialorder %v1651, 0.0
      %vm1656 = vcmp.gt.f32.partialorder %v1652, 0.0
      %vm1657 = vcmp.gt.f32.partialorder %v1653, 0.0
      %vm1658 = vcmp.gt.f32.partialorder %v1654, 0.0
      %v1659 = vsel %vm1655, %v1651, 1.0
      %v1660 = vsel %vm1656, %v1652, 1.0
      %v1661 = vsel %vm1657, %v1653, 1.0
      %v1662 = vsel %vm1658, %v1654, 1.0
      %v1663 = vrcp.pop %v1659
      %v1664 = vrcp.pop %v1660
      %v1665 = vrcp.pop %v1661
      %v1666 = vrcp.pop %v1662
      %v1667 = vmul.f32 %v1659, %v1663
      %v1668 = vmul.f32 %v1660, %v1664
      %v1669 = vmul.f32 %v1661, %v1665
      %v1670 = vmul.f32 %v1662, %v1666
      %v1671 = vsub.f32 2.0, %v1667
      %v1672 = vsub.f32 2.0, %v1668
      %v1673 = vsub.f32 2.0, %v1669
      %v1674 = vsub.f32 2.0, %v1670
      %v1675 = vmul.f32 %v1663, %v1671
      %v1676 = vmul.f32 %v1664, %v1672
      %v1677 = vmul.f32 %v1665, %v1673
      %v1678 = vmul.f32 %v1666, %v1674
      %s1679 = smul.u32 0, 4
      %s1680 = smul.addr %s1679, 8
      %s1681 = scalar_lea.vmem [#allocation7], %s1680
      %v1682 = vld [vmem:[%s1681] sm:$0xff]
      %v1683 = vld [vmem:[%s1681 + $0x8] sm:$0xff]
      %v1684 = vld [vmem:[%s1681 + $0x10] sm:$0xff]
      %v1685 = vld [vmem:[%s1681 + $0x18] sm:$0xff]
      %v1686 = vmul.f32 %v1682, %v1675
      %v1687 = vmul.f32 %v1683, %v1676
      %v1688 = vmul.f32 %v1684, %v1677
      %v1689 = vmul.f32 %v1685, %v1678
      %1690 = vst [vmem:[%s1681] sm:$0xff] %v1686
      %1691 = vst [vmem:[%s1681 + $0x8] sm:$0xff] %v1687
      %1692 = vst [vmem:[%s1681 + $0x10] sm:$0xff] %v1688
      %1693 = vst [vmem:[%s1681 + $0x18] sm:$0xff] %v1689
    $region83: #{tpu_custom_call.1} parent=1 // pred_fallthru
      _
    // Predicated region
    $region84: #{tpu_custom_call.1} parent=1 // pred_check
      _
    $region85: #{tpu_custom_call.1} parent=1 // pred_check_branch
      %1695 = sbr.rel (0) target = $region87
    $region86: #{tpu_custom_call.1} parent=1 // pred_region
      %s1697 = ssub.s32 512, 512
      %1698 = vsyncadd [#allocation8], %s1697
      %s1700 = sshll.u32 [#allocation7], 4
      %s1701 = int_to_ptr.vmem [resolvable:$true] %s1700
      %1703 = dma.vmem_to_hbm [thread:$0]  %s1701, 512, %s10, [#allocation8]
    $region87: #{tpu_custom_call.1} parent=1 // pred_fallthru
      _
    // Predicated region
    $region88: #{tpu_custom_call.1} parent=1 // pred_check
      _
    $region89: #{tpu_custom_call.1} parent=1 // pred_check_branch
      %1705 = sbr.rel (0) target = $region91
    $region90: #{tpu_custom_call.1} parent=1 // pred_region
      %1706 = dma.done [#allocation8], 512
    $region91: #{tpu_custom_call.1} parent=1 // pred_fallthru
      _
    %1707 = vsyncpa [#allocation8], 1

</llo_original>
